<compile_context>
chip_gen: v7x
topology: tpu7x:2x2x1
jax: 0.10.0
libtpu: 0.0.40
codegen_flags: <defaults>
</compile_context>

<pallas_src>
import numpy as np
import jax
import jax.numpy as jnp
from jax.experimental import pallas as pl
from jax.experimental.pallas import tpu as pltpu


# ----------------------------------------------------------------------------
# Fused flow kernel: N affine couplings, permutations folded into the weights
# ----------------------------------------------------------------------------
def _make_fused_flow_kernel(n_couplings):
    def kernel(x_ref, ctx_ref,
               w1x_ref, w1c_ref, b1_ref, w2s_ref, w2t_ref, b2s_ref, b2t_ref,
               y_ref, logdet_ref):
        v = x_ref[...]                       # running activation, ORIGINAL coords
        ctx = ctx_ref[...]
        ld = jnp.zeros((v.shape[0], 1), jnp.float32)

        for i in range(n_couplings):         # unrolled at trace time
            # hidden = relu(x1 @ W1x + ctx @ W1c + b1); x1-slice + permutation
            # are folded into zero-padded rows of W1x, so we dot the full v.
            h = jnp.dot(v, w1x_ref[i], preferred_element_type=jnp.float32)
            h = h + jnp.dot(ctx, w1c_ref[i], preferred_element_type=jnp.float32)
            h = jnp.maximum(h + b1_ref[i], 0.0)

            # Full-width log-scale / shift: passthrough columns of W2s/W2t/b2
            # are zero -> s=tanh(0)=0 (scale 1), t=0 (shift 0) on those lanes.
            s = jnp.tanh(jnp.dot(h, w2s_ref[i], preferred_element_type=jnp.float32)
                         + b2s_ref[i])
            t = jnp.dot(h, w2t_ref[i], preferred_element_type=jnp.float32) + b2t_ref[i]

            v = v * jnp.exp(s) + t
            ld = ld + jnp.sum(s, axis=1, keepdims=True)   # zero cols add nothing

        # v is already in original coordinates == output after the reverse_perm
        # pass of the reference forward().
        y_ref[...] = v
        logdet_ref[...] = ld

    return kernel


def _fused_flow_call(x, ctx, params, n_couplings):
    B, D = x.shape
    C = ctx.shape[1]
    H = params[0].shape[-1]

    block_b = B if B <= 256 else 256
    assert B % block_b == 0, "batch must divide the batch tile"
    grid = (B // block_b,)

    act_spec = pl.BlockSpec((block_b, D), lambda i: (i, 0))
    ctx_spec = pl.BlockSpec((block_b, C), lambda i: (i, 0))
    # Weights: constant index_map -> stay VMEM-resident across grid steps.
    w_specs = [pl.BlockSpec(p.shape, lambda i: (0, 0, 0)) for p in params]
    out_specs = (pl.BlockSpec((block_b, D), lambda i: (i, 0)),
                 pl.BlockSpec((block_b, 1), lambda i: (i, 0)))

    flops = int(n_couplings * B * (2 * H * (D + C) + 4 * H * D + 6 * D))
    transcendentals = int(n_couplings * 2 * B * D)      # tanh + exp per element
    bytes_accessed = int(4 * (x.size + ctx.size
                              + sum(int(p.size) for p in params) + B * D + B))

    y, logdet = pl.pallas_call(
        _make_fused_flow_kernel(n_couplings),
        out_shape=(jax.ShapeDtypeStruct((B, D), jnp.float32),
                   jax.ShapeDtypeStruct((B, 1), jnp.float32)),
        grid=grid,
        in_specs=[act_spec, ctx_spec] + w_specs,
        out_specs=out_specs,
        compiler_params=pltpu.CompilerParams(dimension_semantics=("parallel",)),
        cost_estimate=pl.CostEstimate(flops=flops,
                                      transcendentals=transcendentals,
                                      bytes_accessed=bytes_accessed),
    )(x, ctx, *params)
    return y, logdet[:, 0]


# ----------------------------------------------------------------------------
# Layers (parameter containers + pure-JAX per-layer reference semantics)
# ----------------------------------------------------------------------------
class AffineCoupling:
    """Conditional affine coupling: y = [x1, x2 * exp(tanh(s)) + t]."""

    def __init__(self, key, dim, ctx_dim, hidden):
        assert dim % 2 == 0
        self.dim, self.ctx_dim, self.hidden = dim, ctx_dim, hidden
        self.half = dim // 2
        k1, k2, k3, k4, k5, k6, k7 = jax.random.split(key, 7)
        sc1 = 1.0 / np.sqrt(self.half + ctx_dim)
        sc2 = 1.0 / np.sqrt(hidden)
        self.w1x = jax.random.normal(k1, (self.half, hidden), jnp.float32) * sc1
        self.w1c = jax.random.normal(k2, (ctx_dim, hidden), jnp.float32) * sc1
        self.b1 = jax.random.normal(k3, (1, hidden), jnp.float32) * 0.1
        self.w2s = jax.random.normal(k4, (hidden, self.half), jnp.float32) * sc2
        self.w2t = jax.random.normal(k5, (hidden, self.half), jnp.float32) * sc2
        self.b2s = jax.random.normal(k6, (1, self.half), jnp.float32) * 0.1
        self.b2t = jax.random.normal(k7, (1, self.half), jnp.float32) * 0.1

    def reference(self, x, context):
        x1, x2 = x[:, :self.half], x[:, self.half:]
        h = jnp.maximum(x1 @ self.w1x + context @ self.w1c + self.b1, 0.0)
        s = jnp.tanh(h @ self.w2s + self.b2s)
        t = h @ self.w2t + self.b2t
        y2 = x2 * jnp.exp(s) + t
        return jnp.concatenate([x1, y2], axis=1), jnp.sum(s, axis=1)


class PermLayer:
    """Fixed feature permutation; log_det = 0."""

    def __init__(self, perm):
        perm = np.asarray(perm)
        self.perm_np = perm
        self.perm = jnp.asarray(perm, jnp.int32)
        self.reverse_perm = jnp.asarray(np.argsort(perm), jnp.int32)

    def reference(self, x, context):
        return x[:, self.perm], jnp.zeros((x.shape[0],), jnp.float32)


# ----------------------------------------------------------------------------
# Host-side folding: turn slices + permutations into weight structure
# ----------------------------------------------------------------------------
def _fold_flow_params(layers, dim):
    """Fold the x1/x2 split and all accumulated permutations into zero-padded
    (W1x rows) / column-scattered (W2s, W2t, b2s, b2t) weights, so the fused
    kernel never slices or gathers lanes. Also makes the final reverse_perm
    pass a no-op (the kernel always works in original coordinates)."""
    cur_perm = np.arange(dim)            # logical activation = v[:, cur_perm]
    w1x_l, w1c_l, b1_l, w2s_l, w2t_l, b2s_l, b2t_l = ([] for _ in range(7))

    for layer in layers:
        if isinstance(layer, PermLayer):
            cur_perm = cur_perm[layer.perm_np]
            continue
        half, H = layer.half, layer.hidden
        lo, hi = cur_perm[:half], cur_perm[half:]

        w1x = np.zeros((dim, H), np.float32)
        w1x[lo, :] = np.asarray(layer.w1x)
        w2s = np.zeros((H, dim), np.float32)
        w2s[:, hi] = np.asarray(layer.w2s)
        w2t = np.zeros((H, dim), np.float32)
        w2t[:, hi] = np.asarray(layer.w2t)
        b2s = np.zeros((1, dim), np.float32)
        b2s[:, hi] = np.asarray(layer.b2s)
        b2t = np.zeros((1, dim), np.float32)
        b2t[:, hi] = np.asarray(layer.b2t)

        w1x_l.append(w1x)
        w1c_l.append(np.asarray(layer.w1c, np.float32))
        b1_l.append(np.asarray(layer.b1, np.float32))
        w2s_l.append(w2s)
        w2t_l.append(w2t)
        b2s_l.append(b2s)
        b2t_l.append(b2t)

    stack = lambda lst: jnp.asarray(np.stack(lst, axis=0), jnp.float32)
    return tuple(stack(l) for l in (w1x_l, w1c_l, b1_l, w2s_l, w2t_l, b2s_l, b2t_l))


class Flow:
    """Pallas-fused port of the PyTorch Flow container's forward()."""

    def __init__(self, *layers):
        self.layers = list(layers)
        couplings = [l for l in self.layers if not isinstance(l, PermLayer)]
        assert couplings, "Flow needs at least one coupling layer"
        self.dim = couplings[0].dim
        assert all(c.dim == self.dim and c.hidden == couplings[0].hidden
                   for c in couplings)
        self.n_couplings = len(couplings)
        self.fused_params = _fold_flow_params(self.layers, self.dim)

    def forward(self, x, context):
        # One kernel for the whole flow (couplings + perms + reverse_perm pass).
        return _fused_flow_call(x, context, self.fused_params, self.n_couplings)

    # TODO(synk): invert() (inverse pass) not implemented; only forward() requested.


# ----------------------------------------------------------------------------
# Pure-JAX reference of the original PyTorch forward() semantics
# ----------------------------------------------------------------------------
def _flow_ref(layers, x, context):
    log_det = None
    for layer in layers:
        x, ld = layer.reference(x, context)
        log_det = (log_det if log_det is not None else 0) + ld
    for layer in layers[::-1]:
        if 'Perm' not in type(layer).__name__:
            continue
        x = x[:, layer.reverse_perm]
    return x, log_det


if __name__ == "__main__":
    B, D, C, H = 8, 32, 8, 32   # batch, feature dim, context dim, hidden dim

    key = jax.random.PRNGKey(0)
    kx, kc, k1, k2, k3 = jax.random.split(key, 5)
    x = jax.random.normal(kx, (B, D), jnp.float32)
    context = jax.random.normal(kc, (B, C), jnp.float32)

    rng = np.random.RandomState(0)
    flow = Flow(
        AffineCoupling(k1, D, C, H),
        PermLayer(rng.permutation(D)),
        AffineCoupling(k2, D, C, H),
        PermLayer(rng.permutation(D)),
        AffineCoupling(k3, D, C, H),
    )

    y, log_det = flow.forward(x, context)
    y = jax.block_until_ready(y)
    log_det = jax.block_until_ready(log_det)

    y_ref, ld_ref = _flow_ref(flow.layers, x, context)
    assert y.shape == (B, D) and log_det.shape == (B,)
    assert jnp.allclose(y, y_ref, atol=1e-4, rtol=1e-4), \
        float(jnp.max(jnp.abs(y - y_ref)))
    assert jnp.allclose(log_det, ld_ref, atol=1e-4, rtol=1e-4), \
        float(jnp.max(jnp.abs(log_det - ld_ref)))

    print("KERNEL_OK")
</pallas_src>

<mosaic_0001>
module attributes {stable_mosaic.version = 11 : i64} {
  func.func @kernel(%arg0: i32, %arg1: memref<8x32xf32, #tpu.memory_space<vmem>>, %arg2: memref<8x8xf32, #tpu.memory_space<vmem>>, %arg3: memref<3x32x32xf32, #tpu.memory_space<vmem>>, %arg4: memref<3x8x32xf32, #tpu.memory_space<vmem>>, %arg5: memref<3x1x32xf32, #tpu.memory_space<vmem>>, %arg6: memref<3x32x32xf32, #tpu.memory_space<vmem>>, %arg7: memref<3x32x32xf32, #tpu.memory_space<vmem>>, %arg8: memref<3x1x32xf32, #tpu.memory_space<vmem>>, %arg9: memref<3x1x32xf32, #tpu.memory_space<vmem>>, %arg10: memref<8x32xf32, #tpu.memory_space<vmem>>, %arg11: memref<8x1xf32, #tpu.memory_space<vmem>>) attributes {dimension_semantics = [#tpu.dimension_semantics<parallel>], iteration_bounds = array<i64: 1>, scalar_prefetch = 0 : i64, scratch_operands = 0 : i64, tpu.core_type = #tpu.core_type<tc>, window_params = [{transform_indices = @transform_0, window_bounds = array<i64: 8, 32>}, {transform_indices = @transform_1, window_bounds = array<i64: 8, 8>}, {pipeline_mode = #tpu.pipeline_mode<synchronous>, transform_indices = @transform_2, window_bounds = array<i64: 3, 32, 32>}, {pipeline_mode = #tpu.pipeline_mode<synchronous>, transform_indices = @transform_3, window_bounds = array<i64: 3, 8, 32>}, {pipeline_mode = #tpu.pipeline_mode<synchronous>, transform_indices = @transform_4, window_bounds = array<i64: 3, 1, 32>}, {pipeline_mode = #tpu.pipeline_mode<synchronous>, transform_indices = @transform_5, window_bounds = array<i64: 3, 32, 32>}, {pipeline_mode = #tpu.pipeline_mode<synchronous>, transform_indices = @transform_6, window_bounds = array<i64: 3, 32, 32>}, {pipeline_mode = #tpu.pipeline_mode<synchronous>, transform_indices = @transform_7, window_bounds = array<i64: 3, 1, 32>}, {pipeline_mode = #tpu.pipeline_mode<synchronous>, transform_indices = @transform_8, window_bounds = array<i64: 3, 1, 32>}, {transform_indices = @transform_9, window_bounds = array<i64: 8, 32>}, {transform_indices = @transform_10, window_bounds = array<i64: 8, 1>}]} {
    %c0 = arith.constant 0 : index
    %c0_0 = arith.constant 0 : index
    %0 = vector.load %arg1[%c0, %c0_0] : memref<8x32xf32, #tpu.memory_space<vmem>>, vector<8x32xf32>
    %c0_1 = arith.constant 0 : index
    %c0_2 = arith.constant 0 : index
    %1 = vector.load %arg2[%c0_1, %c0_2] : memref<8x8xf32, #tpu.memory_space<vmem>>, vector<8x8xf32>
    %cst = arith.constant 0.000000e+00 : f32
    %2 = vector.broadcast %cst : f32 to vector<8x1xf32>
    %c0_3 = arith.constant 0 : index
    %c0_4 = arith.constant 0 : index
    %c0_5 = arith.constant 0 : index
    %3 = vector.load %arg3[%c0_3, %c0_4, %c0_5] : memref<3x32x32xf32, #tpu.memory_space<vmem>>, vector<1x32x32xf32>
    %4 = vector.shape_cast %3 : vector<1x32x32xf32> to vector<32x32xf32>
    %cst_6 = arith.constant dense<0.000000e+00> : vector<8x32xf32>
    %5 = tpu.matmul %0, %4, %cst_6 {dimension_numbers = #tpu.dot_dimension_numbers<[1], [0], [0], [1], [0, 0, 1, 1], [], []>} : vector<8x32xf32>, vector<32x32xf32>, vector<8x32xf32> -> vector<8x32xf32>
    %c0_7 = arith.constant 0 : index
    %c0_8 = arith.constant 0 : index
    %c0_9 = arith.constant 0 : index
    %6 = vector.load %arg4[%c0_7, %c0_8, %c0_9] : memref<3x8x32xf32, #tpu.memory_space<vmem>>, vector<1x8x32xf32>
    %7 = vector.shape_cast %6 : vector<1x8x32xf32> to vector<8x32xf32>
    %cst_10 = arith.constant dense<0.000000e+00> : vector<8x32xf32>
    %8 = tpu.matmul %1, %7, %cst_10 {dimension_numbers = #tpu.dot_dimension_numbers<[1], [0], [0], [1], [0, 0, 1, 1], [], []>} : vector<8x8xf32>, vector<8x32xf32>, vector<8x32xf32> -> vector<8x32xf32>
    %9 = arith.addf %5, %8 : vector<8x32xf32>
    %c0_11 = arith.constant 0 : index
    %c0_12 = arith.constant 0 : index
    %c0_13 = arith.constant 0 : index
    %10 = vector.load %arg5[%c0_11, %c0_12, %c0_13] : memref<3x1x32xf32, #tpu.memory_space<vmem>>, vector<1x1x32xf32>
    %11 = vector.shape_cast %10 : vector<1x1x32xf32> to vector<1x32xf32>
    %12 = vector.broadcast %11 : vector<1x32xf32> to vector<8x32xf32>
    %13 = arith.addf %9, %12 : vector<8x32xf32>
    %cst_14 = arith.constant 0.000000e+00 : f32
    %14 = vector.broadcast %cst_14 : f32 to vector<8x32xf32>
    %15 = arith.maximumf %13, %14 : vector<8x32xf32>
    %c0_15 = arith.constant 0 : index
    %c0_16 = arith.constant 0 : index
    %c0_17 = arith.constant 0 : index
    %16 = vector.load %arg6[%c0_15, %c0_16, %c0_17] : memref<3x32x32xf32, #tpu.memory_space<vmem>>, vector<1x32x32xf32>
    %17 = vector.shape_cast %16 : vector<1x32x32xf32> to vector<32x32xf32>
    %cst_18 = arith.constant dense<0.000000e+00> : vector<8x32xf32>
    %18 = tpu.matmul %15, %17, %cst_18 {dimension_numbers = #tpu.dot_dimension_numbers<[1], [0], [0], [1], [0, 0, 1, 1], [], []>} : vector<8x32xf32>, vector<32x32xf32>, vector<8x32xf32> -> vector<8x32xf32>
    %c0_19 = arith.constant 0 : index
    %c0_20 = arith.constant 0 : index
    %c0_21 = arith.constant 0 : index
    %19 = vector.load %arg8[%c0_19, %c0_20, %c0_21] : memref<3x1x32xf32, #tpu.memory_space<vmem>>, vector<1x1x32xf32>
    %20 = vector.shape_cast %19 : vector<1x1x32xf32> to vector<1x32xf32>
    %21 = vector.broadcast %20 : vector<1x32xf32> to vector<8x32xf32>
    %22 = arith.addf %18, %21 : vector<8x32xf32>
    %23 = math.tanh %22 : vector<8x32xf32>
    %c0_22 = arith.constant 0 : index
    %c0_23 = arith.constant 0 : index
    %c0_24 = arith.constant 0 : index
    %24 = vector.load %arg7[%c0_22, %c0_23, %c0_24] : memref<3x32x32xf32, #tpu.memory_space<vmem>>, vector<1x32x32xf32>
    %25 = vector.shape_cast %24 : vector<1x32x32xf32> to vector<32x32xf32>
    %cst_25 = arith.constant dense<0.000000e+00> : vector<8x32xf32>
    %26 = tpu.matmul %15, %25, %cst_25 {dimension_numbers = #tpu.dot_dimension_numbers<[1], [0], [0], [1], [0, 0, 1, 1], [], []>} : vector<8x32xf32>, vector<32x32xf32>, vector<8x32xf32> -> vector<8x32xf32>
    %c0_26 = arith.constant 0 : index
    %c0_27 = arith.constant 0 : index
    %c0_28 = arith.constant 0 : index
    %27 = vector.load %arg9[%c0_26, %c0_27, %c0_28] : memref<3x1x32xf32, #tpu.memory_space<vmem>>, vector<1x1x32xf32>
    %28 = vector.shape_cast %27 : vector<1x1x32xf32> to vector<1x32xf32>
    %29 = vector.broadcast %28 : vector<1x32xf32> to vector<8x32xf32>
    %30 = arith.addf %26, %29 : vector<8x32xf32>
    %31 = math.exp %23 : vector<8x32xf32>
    %32 = arith.mulf %0, %31 : vector<8x32xf32>
    %33 = arith.addf %32, %30 : vector<8x32xf32>
    %cst_29 = arith.constant dense<0.000000e+00> : vector<8xf32>
    %34 = vector.multi_reduction <add>, %23, %cst_29 [1] : vector<8x32xf32> to vector<8xf32>
    %35 = vector.shape_cast %34 : vector<8xf32> to vector<8x1xf32>
    %36 = arith.addf %2, %35 : vector<8x1xf32>
    %c1 = arith.constant 1 : index
    %c0_30 = arith.constant 0 : index
    %c0_31 = arith.constant 0 : index
    %37 = vector.load %arg3[%c1, %c0_30, %c0_31] : memref<3x32x32xf32, #tpu.memory_space<vmem>>, vector<1x32x32xf32>
    %38 = vector.shape_cast %37 : vector<1x32x32xf32> to vector<32x32xf32>
    %cst_32 = arith.constant dense<0.000000e+00> : vector<8x32xf32>
    %39 = tpu.matmul %33, %38, %cst_32 {dimension_numbers = #tpu.dot_dimension_numbers<[1], [0], [0], [1], [0, 0, 1, 1], [], []>} : vector<8x32xf32>, vector<32x32xf32>, vector<8x32xf32> -> vector<8x32xf32>
    %c1_33 = arith.constant 1 : index
    %c0_34 = arith.constant 0 : index
    %c0_35 = arith.constant 0 : index
    %40 = vector.load %arg4[%c1_33, %c0_34, %c0_35] : memref<3x8x32xf32, #tpu.memory_space<vmem>>, vector<1x8x32xf32>
    %41 = vector.shape_cast %40 : vector<1x8x32xf32> to vector<8x32xf32>
    %cst_36 = arith.constant dense<0.000000e+00> : vector<8x32xf32>
    %42 = tpu.matmul %1, %41, %cst_36 {dimension_numbers = #tpu.dot_dimension_numbers<[1], [0], [0], [1], [0, 0, 1, 1], [], []>} : vector<8x8xf32>, vector<8x32xf32>, vector<8x32xf32> -> vector<8x32xf32>
    %43 = arith.addf %39, %42 : vector<8x32xf32>
    %c1_37 = arith.constant 1 : index
    %c0_38 = arith.constant 0 : index
    %c0_39 = arith.constant 0 : index
    %44 = vector.load %arg5[%c1_37, %c0_38, %c0_39] : memref<3x1x32xf32, #tpu.memory_space<vmem>>, vector<1x1x32xf32>
    %45 = vector.shape_cast %44 : vector<1x1x32xf32> to vector<1x32xf32>
    %46 = vector.broadcast %45 : vector<1x32xf32> to vector<8x32xf32>
    %47 = arith.addf %43, %46 : vector<8x32xf32>
    %cst_40 = arith.constant 0.000000e+00 : f32
    %48 = vector.broadcast %cst_40 : f32 to vector<8x32xf32>
    %49 = arith.maximumf %47, %48 : vector<8x32xf32>
    %c1_41 = arith.constant 1 : index
    %c0_42 = arith.constant 0 : index
    %c0_43 = arith.constant 0 : index
    %50 = vector.load %arg6[%c1_41, %c0_42, %c0_43] : memref<3x32x32xf32, #tpu.memory_space<vmem>>, vector<1x32x32xf32>
    %51 = vector.shape_cast %50 : vector<1x32x32xf32> to vector<32x32xf32>
    %cst_44 = arith.constant dense<0.000000e+00> : vector<8x32xf32>
    %52 = tpu.matmul %49, %51, %cst_44 {dimension_numbers = #tpu.dot_dimension_numbers<[1], [0], [0], [1], [0, 0, 1, 1], [], []>} : vector<8x32xf32>, vector<32x32xf32>, vector<8x32xf32> -> vector<8x32xf32>
    %c1_45 = arith.constant 1 : index
    %c0_46 = arith.constant 0 : index
    %c0_47 = arith.constant 0 : index
    %53 = vector.load %arg8[%c1_45, %c0_46, %c0_47] : memref<3x1x32xf32, #tpu.memory_space<vmem>>, vector<1x1x32xf32>
    %54 = vector.shape_cast %53 : vector<1x1x32xf32> to vector<1x32xf32>
    %55 = vector.broadcast %54 : vector<1x32xf32> to vector<8x32xf32>
    %56 = arith.addf %52, %55 : vector<8x32xf32>
    %57 = math.tanh %56 : vector<8x32xf32>
    %c1_48 = arith.constant 1 : index
    %c0_49 = arith.constant 0 : index
    %c0_50 = arith.constant 0 : index
    %58 = vector.load %arg7[%c1_48, %c0_49, %c0_50] : memref<3x32x32xf32, #tpu.memory_space<vmem>>, vector<1x32x32xf32>
    %59 = vector.shape_cast %58 : vector<1x32x32xf32> to vector<32x32xf32>
    %cst_51 = arith.constant dense<0.000000e+00> : vector<8x32xf32>
    %60 = tpu.matmul %49, %59, %cst_51 {dimension_numbers = #tpu.dot_dimension_numbers<[1], [0], [0], [1], [0, 0, 1, 1], [], []>} : vector<8x32xf32>, vector<32x32xf32>, vector<8x32xf32> -> vector<8x32xf32>
    %c1_52 = arith.constant 1 : index
    %c0_53 = arith.constant 0 : index
    %c0_54 = arith.constant 0 : index
    %61 = vector.load %arg9[%c1_52, %c0_53, %c0_54] : memref<3x1x32xf32, #tpu.memory_space<vmem>>, vector<1x1x32xf32>
    %62 = vector.shape_cast %61 : vector<1x1x32xf32> to vector<1x32xf32>
    %63 = vector.broadcast %62 : vector<1x32xf32> to vector<8x32xf32>
    %64 = arith.addf %60, %63 : vector<8x32xf32>
    %65 = math.exp %57 : vector<8x32xf32>
    %66 = arith.mulf %33, %65 : vector<8x32xf32>
    %67 = arith.addf %66, %64 : vector<8x32xf32>
    %cst_55 = arith.constant dense<0.000000e+00> : vector<8xf32>
    %68 = vector.multi_reduction <add>, %57, %cst_55 [1] : vector<8x32xf32> to vector<8xf32>
    %69 = vector.shape_cast %68 : vector<8xf32> to vector<8x1xf32>
    %70 = arith.addf %36, %69 : vector<8x1xf32>
    %c2 = arith.constant 2 : index
    %c0_56 = arith.constant 0 : index
    %c0_57 = arith.constant 0 : index
    %71 = vector.load %arg3[%c2, %c0_56, %c0_57] : memref<3x32x32xf32, #tpu.memory_space<vmem>>, vector<1x32x32xf32>
    %72 = vector.shape_cast %71 : vector<1x32x32xf32> to vector<32x32xf32>
    %cst_58 = arith.constant dense<0.000000e+00> : vector<8x32xf32>
    %73 = tpu.matmul %67, %72, %cst_58 {dimension_numbers = #tpu.dot_dimension_numbers<[1], [0], [0], [1], [0, 0, 1, 1], [], []>} : vector<8x32xf32>, vector<32x32xf32>, vector<8x32xf32> -> vector<8x32xf32>
    %c2_59 = arith.constant 2 : index
    %c0_60 = arith.constant 0 : index
    %c0_61 = arith.constant 0 : index
    %74 = vector.load %arg4[%c2_59, %c0_60, %c0_61] : memref<3x8x32xf32, #tpu.memory_space<vmem>>, vector<1x8x32xf32>
    %75 = vector.shape_cast %74 : vector<1x8x32xf32> to vector<8x32xf32>
    %cst_62 = arith.constant dense<0.000000e+00> : vector<8x32xf32>
    %76 = tpu.matmul %1, %75, %cst_62 {dimension_numbers = #tpu.dot_dimension_numbers<[1], [0], [0], [1], [0, 0, 1, 1], [], []>} : vector<8x8xf32>, vector<8x32xf32>, vector<8x32xf32> -> vector<8x32xf32>
    %77 = arith.addf %73, %76 : vector<8x32xf32>
    %c2_63 = arith.constant 2 : index
    %c0_64 = arith.constant 0 : index
    %c0_65 = arith.constant 0 : index
    %78 = vector.load %arg5[%c2_63, %c0_64, %c0_65] : memref<3x1x32xf32, #tpu.memory_space<vmem>>, vector<1x1x32xf32>
    %79 = vector.shape_cast %78 : vector<1x1x32xf32> to vector<1x32xf32>
    %80 = vector.broadcast %79 : vector<1x32xf32> to vector<8x32xf32>
    %81 = arith.addf %77, %80 : vector<8x32xf32>
    %cst_66 = arith.constant 0.000000e+00 : f32
    %82 = vector.broadcast %cst_66 : f32 to vector<8x32xf32>
    %83 = arith.maximumf %81, %82 : vector<8x32xf32>
    %c2_67 = arith.constant 2 : index
    %c0_68 = arith.constant 0 : index
    %c0_69 = arith.constant 0 : index
    %84 = vector.load %arg6[%c2_67, %c0_68, %c0_69] : memref<3x32x32xf32, #tpu.memory_space<vmem>>, vector<1x32x32xf32>
    %85 = vector.shape_cast %84 : vector<1x32x32xf32> to vector<32x32xf32>
    %cst_70 = arith.constant dense<0.000000e+00> : vector<8x32xf32>
    %86 = tpu.matmul %83, %85, %cst_70 {dimension_numbers = #tpu.dot_dimension_numbers<[1], [0], [0], [1], [0, 0, 1, 1], [], []>} : vector<8x32xf32>, vector<32x32xf32>, vector<8x32xf32> -> vector<8x32xf32>
    %c2_71 = arith.constant 2 : index
    %c0_72 = arith.constant 0 : index
    %c0_73 = arith.constant 0 : index
    %87 = vector.load %arg8[%c2_71, %c0_72, %c0_73] : memref<3x1x32xf32, #tpu.memory_space<vmem>>, vector<1x1x32xf32>
    %88 = vector.shape_cast %87 : vector<1x1x32xf32> to vector<1x32xf32>
    %89 = vector.broadcast %88 : vector<1x32xf32> to vector<8x32xf32>
    %90 = arith.addf %86, %89 : vector<8x32xf32>
    %91 = math.tanh %90 : vector<8x32xf32>
    %c2_74 = arith.constant 2 : index
    %c0_75 = arith.constant 0 : index
    %c0_76 = arith.constant 0 : index
    %92 = vector.load %arg7[%c2_74, %c0_75, %c0_76] : memref<3x32x32xf32, #tpu.memory_space<vmem>>, vector<1x32x32xf32>
    %93 = vector.shape_cast %92 : vector<1x32x32xf32> to vector<32x32xf32>
    %cst_77 = arith.constant dense<0.000000e+00> : vector<8x32xf32>
    %94 = tpu.matmul %83, %93, %cst_77 {dimension_numbers = #tpu.dot_dimension_numbers<[1], [0], [0], [1], [0, 0, 1, 1], [], []>} : vector<8x32xf32>, vector<32x32xf32>, vector<8x32xf32> -> vector<8x32xf32>
    %c2_78 = arith.constant 2 : index
    %c0_79 = arith.constant 0 : index
    %c0_80 = arith.constant 0 : index
    %95 = vector.load %arg9[%c2_78, %c0_79, %c0_80] : memref<3x1x32xf32, #tpu.memory_space<vmem>>, vector<1x1x32xf32>
    %96 = vector.shape_cast %95 : vector<1x1x32xf32> to vector<1x32xf32>
    %97 = vector.broadcast %96 : vector<1x32xf32> to vector<8x32xf32>
    %98 = arith.addf %94, %97 : vector<8x32xf32>
    %99 = math.exp %91 : vector<8x32xf32>
    %100 = arith.mulf %67, %99 : vector<8x32xf32>
    %101 = arith.addf %100, %98 : vector<8x32xf32>
    %cst_81 = arith.constant dense<0.000000e+00> : vector<8xf32>
    %102 = vector.multi_reduction <add>, %91, %cst_81 [1] : vector<8x32xf32> to vector<8xf32>
    %103 = vector.shape_cast %102 : vector<8xf32> to vector<8x1xf32>
    %104 = arith.addf %70, %103 : vector<8x1xf32>
    %c0_82 = arith.constant 0 : index
    %c0_83 = arith.constant 0 : index
    %105 = vector.load %arg10[%c0_82, %c0_83] : memref<8x32xf32, #tpu.memory_space<vmem>>, vector<8x32xf32>
    tpu.vector_store %arg10[%c0_82, %c0_83], %101 {strides = array<i32>} : memref<8x32xf32, #tpu.memory_space<vmem>>, vector<8x32xf32>,
    %c0_84 = arith.constant 0 : index
    %c0_85 = arith.constant 0 : index
    %106 = vector.load %arg11[%c0_84, %c0_85] : memref<8x1xf32, #tpu.memory_space<vmem>>, vector<8x1xf32>
    tpu.vector_store %arg11[%c0_84, %c0_85], %104 {strides = array<i32>} : memref<8x1xf32, #tpu.memory_space<vmem>>, vector<8x1xf32>,
    return
  }
  func.func @transform_0(%arg0: i32) -> (i32, i32) {
    %c0_i32 = arith.constant 0 : i32
    %c0_i32_0 = arith.constant 0 : i32
    return %arg0, %c0_i32 : i32, i32
  }
  func.func @transform_1(%arg0: i32) -> (i32, i32) {
    %c0_i32 = arith.constant 0 : i32
    %c0_i32_0 = arith.constant 0 : i32
    return %arg0, %c0_i32 : i32, i32
  }
  func.func @transform_2(%arg0: i32) -> (i32, i32, i32) {
    %c0_i32 = arith.constant 0 : i32
    %c0_i32_0 = arith.constant 0 : i32
    %c0_i32_1 = arith.constant 0 : i32
    %c0_i32_2 = arith.constant 0 : i32
    return %c0_i32, %c0_i32_0, %c0_i32_1 : i32, i32, i32
  }
  func.func @transform_3(%arg0: i32) -> (i32, i32, i32) {
    %c0_i32 = arith.constant 0 : i32
    %c0_i32_0 = arith.constant 0 : i32
    %c0_i32_1 = arith.constant 0 : i32
    %c0_i32_2 = arith.constant 0 : i32
    return %c0_i32, %c0_i32_0, %c0_i32_1 : i32, i32, i32
  }
  func.func @transform_4(%arg0: i32) -> (i32, i32, i32) {
    %c0_i32 = arith.constant 0 : i32
    %c0_i32_0 = arith.constant 0 : i32
    %c0_i32_1 = arith.constant 0 : i32
    %c0_i32_2 = arith.constant 0 : i32
    return %c0_i32, %c0_i32_0, %c0_i32_1 : i32, i32, i32
  }
  func.func @transform_5(%arg0: i32) -> (i32, i32, i32) {
    %c0_i32 = arith.constant 0 : i32
    %c0_i32_0 = arith.constant 0 : i32
    %c0_i32_1 = arith.constant 0 : i32
    %c0_i32_2 = arith.constant 0 : i32
    return %c0_i32, %c0_i32_0, %c0_i32_1 : i32, i32, i32
  }
  func.func @transform_6(%arg0: i32) -> (i32, i32, i32) {
    %c0_i32 = arith.constant 0 : i32
    %c0_i32_0 = arith.constant 0 : i32
    %c0_i32_1 = arith.constant 0 : i32
    %c0_i32_2 = arith.constant 0 : i32
    return %c0_i32, %c0_i32_0, %c0_i32_1 : i32, i32, i32
  }
  func.func @transform_7(%arg0: i32) -> (i32, i32, i32) {
    %c0_i32 = arith.constant 0 : i32
    %c0_i32_0 = arith.constant 0 : i32
    %c0_i32_1 = arith.constant 0 : i32
    %c0_i32_2 = arith.constant 0 : i32
    return %c0_i32, %c0_i32_0, %c0_i32_1 : i32, i32, i32
  }
  func.func @transform_8(%arg0: i32) -> (i32, i32, i32) {
    %c0_i32 = arith.constant 0 : i32
    %c0_i32_0 = arith.constant 0 : i32
    %c0_i32_1 = arith.constant 0 : i32
    %c0_i32_2 = arith.constant 0 : i32
    return %c0_i32, %c0_i32_0, %c0_i32_1 : i32, i32, i32
  }
  func.func @transform_9(%arg0: i32) -> (i32, i32) {
    %c0_i32 = arith.constant 0 : i32
    %c0_i32_0 = arith.constant 0 : i32
    return %arg0, %c0_i32 : i32, i32
  }
  func.func @transform_10(%arg0: i32) -> (i32, i32) {
    %c0_i32 = arith.constant 0 : i32
    %c0_i32_0 = arith.constant 0 : i32
    return %arg0, %c0_i32 : i32, i32
  }
}

</mosaic_0001>

<llo_original>
// kernel: tpu_custom_call.1
$region0: #{tpu_custom_call.1}
  #allocation0 [shape = 'u32[]', space=smem, size = 0x4, offset = 0x4, fixed_abs, tag = 'smem constant byte address 0x4 - core index']
  #allocation1 [shape = 'u32[144,128]{1,0:T(1,128)}', space=vmem, size = 0x12000, scoped, tag = 'internal scratch']
  %s0 = inlined_call_operand.hbm [shape: f32[8,32], index: 0, kind: input, shape index: {}]
  %s1 = inlined_call_operand.hbm [shape: f32[8,8], index: 1, kind: input, shape index: {}]
  %s2 = inlined_call_operand.hbm [shape: f32[3,32,32], index: 2, kind: input, shape index: {}]
  %s3 = inlined_call_operand.hbm [shape: f32[3,8,32], index: 3, kind: input, shape index: {}]
  %s4 = inlined_call_operand.vmem [shape: f32[3,1,32], index: 4, kind: input, shape index: {}]
  %s5 = inlined_call_operand.hbm [shape: f32[3,32,32], index: 5, kind: input, shape index: {}]
  %s6 = inlined_call_operand.hbm [shape: f32[3,32,32], index: 6, kind: input, shape index: {}]
  %s7 = inlined_call_operand.vmem [shape: f32[3,1,32], index: 7, kind: input, shape index: {}]
  %s8 = inlined_call_operand.vmem [shape: f32[3,1,32], index: 8, kind: input, shape index: {}]
  %s9 = inlined_call_operand.hbm [shape: f32[8,32], index: 9, kind: output, shape index: {0}]
  %s10 = inlined_call_operand.vmem [shape: f32[8,1], index: 10, kind: output, shape index: {1}]
  %11 = xla_tuple %s9, %s10
  %s12 = sld [smem:[#allocation0]]
  $region78: #{tpu_custom_call.1} parent=0
    _
  %s14 = ssub.s32 1, %s12
  %s15 = scalar_select 0, %s14, %s12
  $region1: #{tpu_custom_call.1} parent=0
    #allocation2 [shape = 'u8[4096]{0}', space=vmem, size = 0x1000, scoped, tag = 'input window, operand 0, single buffered']
    #allocation3 [shape = 's32[1]{0}', space=sflag, size = 0x4, scoped, tag = 'scoped memory for tpu_custom_call.1']
    #allocation4 [shape = 's32[1]{0}', space=sflag, size = 0x4, scoped, tag = 'scoped memory for tpu_custom_call.1']
    #allocation5 [shape = 'u8[4096]{0}', space=vmem, size = 0x1000, scoped, tag = 'input window, operand 1, single buffered']
    #allocation6 [shape = 's32[1]{0}', space=sflag, size = 0x4, scoped, tag = 'scoped memory for tpu_custom_call.1']
    #allocation7 [shape = 'u8[49152]{0}', space=vmem, size = 0xc000, scoped, tag = 'input window, operand 2, single buffered']
    #allocation8 [shape = 'u8[12288]{0}', space=vmem, size = 0x3000, scoped, tag = 'input window, operand 3, single buffered']
    #allocation9 [shape = 's32[1]{0}', space=sflag, size = 0x4, scoped, tag = 'scoped memory for tpu_custom_call.1']
    #allocation10 [shape = 'u8[49152]{0}', space=vmem, size = 0xc000, scoped, tag = 'input window, operand 5, single buffered']
    #allocation11 [shape = 'u8[49152]{0}', space=vmem, size = 0xc000, scoped, tag = 'input window, operand 6, single buffered']
    #allocation12 [shape = 's32[1]{0}', space=sflag, size = 0x4, scoped, tag = 'scoped memory for tpu_custom_call.1']
    #allocation13 [shape = 'u8[4096]{0}', space=vmem, size = 0x1000, scoped, tag = 'output window, operand 0, single buffered']
    %16 = vsyncpa [#allocation3], 0
    %17 = vsyncpa [#allocation6], 0
    %18 = vsyncpa [#allocation9], 0
    %19 = vsyncpa [#allocation12], 0
    %20 = vsyncpa [#allocation4], 0
    // Predicated region
    $region2: #{tpu_custom_call.1} parent=1 // pred_check
      _
    $region3: #{tpu_custom_call.1} parent=1 // pred_check_branch
      %22 = sbr.rel (0) target = $region5
    $region4: #{tpu_custom_call.1} parent=1 // pred_region
      %s24 = ssub.s32 128, 128
      %25 = vsyncadd [#allocation3], %s24
      %s27 = sshll.u32 [#allocation2], 4
      %s28 = int_to_ptr.vmem [resolvable:$true] %s27
      %30 = dma.hbm_to_vmem [thread:$0]  %s0, 128, %s28, [#allocation3]
    $region5: #{tpu_custom_call.1} parent=1 // pred_fallthru
      _
    // Predicated region
    $region6: #{tpu_custom_call.1} parent=1 // pred_check
      _
    $region7: #{tpu_custom_call.1} parent=1 // pred_check_branch
      %32 = sbr.rel (0) target = $region9
    $region8: #{tpu_custom_call.1} parent=1 // pred_region
      %s34 = ssub.s32 128, 128
      %35 = vsyncadd [#allocation6], %s34
      %s37 = sshll.u32 [#allocation5], 4
      %s38 = int_to_ptr.vmem [resolvable:$true] %s37
      %40 = dma.hbm_to_vmem [thread:$0]  %s1, 128, %s38, [#allocation6]
    $region9: #{tpu_custom_call.1} parent=1 // pred_fallthru
      _
    // Predicated region
    $region10: #{tpu_custom_call.1} parent=1 // pred_check
      _
    $region11: #{tpu_custom_call.1} parent=1 // pred_check_branch
      %42 = sbr.rel (0) target = $region13
    $region12: #{tpu_custom_call.1} parent=1 // pred_region
      %s44 = ssub.s32 1536, 1536
      %45 = vsyncadd [#allocation6], %s44
      %s46 = sshll.u32 [#allocation7], 4
      %s47 = int_to_ptr.vmem [resolvable:$true] %s46
      %52 = dma.hbm_to_vmem [thread:$0]  %s2, 1536, %s47, [#allocation6], 128, 128, 8
    $region13: #{tpu_custom_call.1} parent=1 // pred_fallthru
      _
    // Predicated region
    $region14: #{tpu_custom_call.1} parent=1 // pred_check
      _
    $region15: #{tpu_custom_call.1} parent=1 // pred_check_branch
      %54 = sbr.rel (0) target = $region17
    $region16: #{tpu_custom_call.1} parent=1 // pred_region
      %s56 = ssub.s32 384, 384
      %57 = vsyncadd [#allocation9], %s56
      %s58 = sshll.u32 [#allocation8], 4
      %s59 = int_to_ptr.vmem [resolvable:$true] %s58
      %64 = dma.hbm_to_vmem [thread:$0]  %s3, 384, %s59, [#allocation9], 128, 128, 8
    $region17: #{tpu_custom_call.1} parent=1 // pred_fallthru
      _
    // Predicated region
    $region18: #{tpu_custom_call.1} parent=1 // pred_check
      _
    $region19: #{tpu_custom_call.1} parent=1 // pred_check_branch
      %66 = sbr.rel (0) target = $region21
    $region20: #{tpu_custom_call.1} parent=1 // pred_region
      _
    $region21: #{tpu_custom_call.1} parent=1 // pred_fallthru
      _
    // Predicated region
    $region22: #{tpu_custom_call.1} parent=1 // pred_check
      _
    $region23: #{tpu_custom_call.1} parent=1 // pred_check_branch
      %68 = sbr.rel (0) target = $region25
    $region24: #{tpu_custom_call.1} parent=1 // pred_region
      %s70 = ssub.s32 1536, 1536
      %71 = vsyncadd [#allocation9], %s70
      %s72 = sshll.u32 [#allocation10], 4
      %s73 = int_to_ptr.vmem [resolvable:$true] %s72
      %78 = dma.hbm_to_vmem [thread:$0]  %s5, 1536, %s73, [#allocation9], 128, 128, 8
    $region25: #{tpu_custom_call.1} parent=1 // pred_fallthru
      _
    // Predicated region
    $region26: #{tpu_custom_call.1} parent=1 // pred_check
      _
    $region27: #{tpu_custom_call.1} parent=1 // pred_check_branch
      %80 = sbr.rel (0) target = $region29
    $region28: #{tpu_custom_call.1} parent=1 // pred_region
      %s82 = ssub.s32 1536, 1536
      %83 = vsyncadd [#allocation12], %s82
      %s84 = sshll.u32 [#allocation11], 4
      %s85 = int_to_ptr.vmem [resolvable:$true] %s84
      %90 = dma.hbm_to_vmem [thread:$0]  %s6, 1536, %s85, [#allocation12], 128, 128, 8
    $region29: #{tpu_custom_call.1} parent=1 // pred_fallthru
      _
    // Predicated region
    $region30: #{tpu_custom_call.1} parent=1 // pred_check
      _
    $region31: #{tpu_custom_call.1} parent=1 // pred_check_branch
      %92 = sbr.rel (0) target = $region33
    $region32: #{tpu_custom_call.1} parent=1 // pred_region
      _
    $region33: #{tpu_custom_call.1} parent=1 // pred_fallthru
      _
    // Predicated region
    $region34: #{tpu_custom_call.1} parent=1 // pred_check
      _
    $region35: #{tpu_custom_call.1} parent=1 // pred_check_branch
      %94 = sbr.rel (0) target = $region37
    $region36: #{tpu_custom_call.1} parent=1 // pred_region
      _
    $region37: #{tpu_custom_call.1} parent=1 // pred_fallthru
      _
    // Predicated region
    $region38: #{tpu_custom_call.1} parent=1 // pred_check
      _
    $region39: #{tpu_custom_call.1} parent=1 // pred_check_branch
      %96 = sbr.rel (0) target = $region41
    $region40: #{tpu_custom_call.1} parent=1 // pred_region
      %97 = dma.done [#allocation3], 128
    $region41: #{tpu_custom_call.1} parent=1 // pred_fallthru
      _
    // Predicated region
    $region42: #{tpu_custom_call.1} parent=1 // pred_check
      _
    $region43: #{tpu_custom_call.1} parent=1 // pred_check_branch
      %99 = sbr.rel (0) target = $region45
    $region44: #{tpu_custom_call.1} parent=1 // pred_region
      %100 = dma.done [#allocation6], 128
    $region45: #{tpu_custom_call.1} parent=1 // pred_fallthru
      _
    // Predicated region
    $region46: #{tpu_custom_call.1} parent=1 // pred_check
      _
    $region47: #{tpu_custom_call.1} parent=1 // pred_check_branch
      %102 = sbr.rel (0) target = $region49
    $region48: #{tpu_custom_call.1} parent=1 // pred_region
      %103 = dma.done [#allocation6], 1536
    $region49: #{tpu_custom_call.1} parent=1 // pred_fallthru
      _
    // Predicated region
    $region50: #{tpu_custom_call.1} parent=1 // pred_check
      _
    $region51: #{tpu_custom_call.1} parent=1 // pred_check_branch
      %105 = sbr.rel (0) target = $region53
    $region52: #{tpu_custom_call.1} parent=1 // pred_region
      %106 = dma.done [#allocation9], 384
    $region53: #{tpu_custom_call.1} parent=1 // pred_fallthru
      _
    // Predicated region
    $region54: #{tpu_custom_call.1} parent=1 // pred_check
      _
    $region55: #{tpu_custom_call.1} parent=1 // pred_check_branch
      %108 = sbr.rel (0) target = $region57
    $region56: #{tpu_custom_call.1} parent=1 // pred_region
      %109 = dma.done [#allocation9], 1536
    $region57: #{tpu_custom_call.1} parent=1 // pred_fallthru
      _
    // Predicated region
    $region58: #{tpu_custom_call.1} parent=1 // pred_check
      _
    $region59: #{tpu_custom_call.1} parent=1 // pred_check_branch
      %111 = sbr.rel (0) target = $region61
    $region60: #{tpu_custom_call.1} parent=1 // pred_region
      %112 = dma.done [#allocation12], 1536
    $region61: #{tpu_custom_call.1} parent=1 // pred_fallthru
      _
    %v113 = vld [vmem:[#allocation2] sm:$0xff]
    %v114 = vld [vmem:[#allocation5] sm:$0xff]
    %v115 = vld [vmem:[#allocation7] sm:$0xff]
    %v116 = vld [vmem:[#allocation7 + $0x8] sm:$0xff]
    %v117 = vld [vmem:[#allocation7 + $0x10] sm:$0xff]
    %v118 = vld [vmem:[#allocation7 + $0x18] sm:$0xff]
    %v119 = vld [vmem:[#allocation8] sm:$0xff]
    %vm120 = vcmask 64512
    %v122 = vsel %vm120, %v114, 0
    %124 = vmatprep.subr.mxu0 0.0
    %125 = vmatpush1.msra.mxu0 %v119
    %126 = vmatprep.subr.mxu0 0.0
    %127 = vmatpush1.msra.mxu0 0.0
    %128 = vmatprep.subr.mxu0 0.0
    %129 = vmatpush1.msra.mxu0 0.0
    %130 = vmatprep.subr.mxu0 0.0
    %131 = vmatpush1.msra.mxu0 0.0
    %132 = vmatprep.subr.mxu0 0.0
    %133 = vmatpush1.msra.mxu0 0.0
    %134 = vmatprep.subr.mxu0 0.0
    %135 = vmatpush1.msra.mxu0 0.0
    %136 = vmatprep.subr.mxu0 0.0
    %137 = vmatpush1.msra.mxu0 0.0
    %138 = vmatprep.subr.mxu0 0.0
    %139 = vmatpush1.msra.mxu0 0.0
    %140 = vmatprep.subr.mxu0 0.0
    %141 = vmatpush1.msra.mxu0 0.0
    %142 = vmatprep.subr.mxu0 0.0
    %143 = vmatpush1.msra.mxu0 0.0
    %144 = vmatprep.subr.mxu0 0.0
    %145 = vmatpush1.msra.mxu0 0.0
    %146 = vmatprep.subr.mxu0 0.0
    %147 = vmatpush1.msra.mxu0 0.0
    %148 = vmatprep.subr.mxu0 0.0
    %149 = vmatpush1.msra.mxu0 0.0
    %150 = vmatprep.subr.mxu0 0.0
    %151 = vmatpush1.msra.mxu0 0.0
    %152 = vmatprep.subr.mxu0 0.0
    %153 = vmatpush1.msra.mxu0 0.0
    %154 = vmatprep.subr.mxu0 0.0
    %155 = vmatpush1.msra.mxu0 0.0
    %156 = vmatprep.subr.mxu0 0.0
    %157 = vmatpush1.msra.mxu0 0.0
    %158 = vmatprep.subr.mxu0 0.0
    %159 = vmatpush1.msra.mxu0 0.0
    %160 = vmatprep.subr.mxu0 0.0
    %161 = vmatpush1.msra.mxu0 0.0
    %162 = vmatprep.subr.mxu0 0.0
    %163 = vmatpush1.msra.mxu0 0.0
    %164 = vmatprep.subr.mxu0 0.0
    %165 = vmatpush1.msra.mxu0 0.0
    %166 = vmatprep.subr.mxu0 0.0
    %167 = vmatpush1.msra.mxu0 0.0
    %168 = vmatprep.subr.mxu0 0.0
    %169 = vmatpush1.msra.mxu0 0.0
    %170 = vmatprep.subr.mxu0 0.0
    %171 = vmatpush1.msra.mxu0 0.0
    %172 = vmatprep.subr.mxu0 0.0
    %173 = vmatpush1.msra.mxu0 0.0
    %174 = vmatprep.subr.mxu0 0.0
    %175 = vmatpush1.msra.mxu0 0.0
    %176 = vmatprep.subr.mxu0 0.0
    %177 = vmatpush1.msra.mxu0 0.0
    %178 = vmatprep.subr.mxu0 0.0
    %179 = vmatpush1.msra.mxu0 0.0
    %180 = vmatprep.subr.mxu0 0.0
    %181 = vmatpush1.msra.mxu0 0.0
    %182 = vmatprep.subr.mxu0 0.0
    %183 = vmatpush1.msra.mxu0 0.0
    %184 = vmatprep.subr.mxu0 0.0
    %185 = vmatpush1.msra.mxu0 0.0
    %186 = vmatprep.subr.mxu0 0.0
    %187 = vmatpush1.msra.mxu0 0.0
    %188 = vmatprep.mubr.f32.mxu0 0.0
    %189 = vmatmul.mubr.f32.gmra.mrb[0].mxu0 %v122
    %v190 = vpop.f32.mrb[0].mxu0
    %v191 = vadd.f32 0.0, %v190
    %v192 = vpop.f32.mrb[0].mxu0
    %193 = vdwg.mxu0
    %vm194 = vcmask 261120
    %v196 = vsel %vm194, %v113, 0
    %198 = vmatprep.subr.mxu0 0.0
    %199 = vmatpush1.msra.mxu0 %v115
    %200 = vmatprep.subr.mxu0 0.0
    %201 = vmatpush1.msra.mxu0 %v116
    %202 = vmatprep.subr.mxu0 0.0
    %203 = vmatpush1.msra.mxu0 %v117
    %204 = vmatprep.subr.mxu0 0.0
    %205 = vmatpush1.msra.mxu0 %v118
    %206 = vmatprep.subr.mxu0 0.0
    %207 = vmatpush1.msra.mxu0 0.0
    %208 = vmatprep.subr.mxu0 0.0
    %209 = vmatpush1.msra.mxu0 0.0
    %210 = vmatprep.subr.mxu0 0.0
    %211 = vmatpush1.msra.mxu0 0.0
    %212 = vmatprep.subr.mxu0 0.0
    %213 = vmatpush1.msra.mxu0 0.0
    %214 = vmatprep.subr.mxu0 0.0
    %215 = vmatpush1.msra.mxu0 0.0
    %216 = vmatprep.subr.mxu0 0.0
    %217 = vmatpush1.msra.mxu0 0.0
    %218 = vmatprep.subr.mxu0 0.0
    %219 = vmatpush1.msra.mxu0 0.0
    %220 = vmatprep.subr.mxu0 0.0
    %221 = vmatpush1.msra.mxu0 0.0
    %222 = vmatprep.subr.mxu0 0.0
    %223 = vmatpush1.msra.mxu0 0.0
    %224 = vmatprep.subr.mxu0 0.0
    %225 = vmatpush1.msra.mxu0 0.0
    %226 = vmatprep.subr.mxu0 0.0
    %227 = vmatpush1.msra.mxu0 0.0
    %228 = vmatprep.subr.mxu0 0.0
    %229 = vmatpush1.msra.mxu0 0.0
    %230 = vmatprep.subr.mxu0 0.0
    %231 = vmatpush1.msra.mxu0 0.0
    %232 = vmatprep.subr.mxu0 0.0
    %233 = vmatpush1.msra.mxu0 0.0
    %234 = vmatprep.subr.mxu0 0.0
    %235 = vmatpush1.msra.mxu0 0.0
    %236 = vmatprep.subr.mxu0 0.0
    %237 = vmatpush1.msra.mxu0 0.0
    %238 = vmatprep.subr.mxu0 0.0
    %239 = vmatpush1.msra.mxu0 0.0
    %240 = vmatprep.subr.mxu0 0.0
    %241 = vmatpush1.msra.mxu0 0.0
    %242 = vmatprep.subr.mxu0 0.0
    %243 = vmatpush1.msra.mxu0 0.0
    %244 = vmatprep.subr.mxu0 0.0
    %245 = vmatpush1.msra.mxu0 0.0
    %246 = vmatprep.subr.mxu0 0.0
    %247 = vmatpush1.msra.mxu0 0.0
    %248 = vmatprep.subr.mxu0 0.0
    %249 = vmatpush1.msra.mxu0 0.0
    %250 = vmatprep.subr.mxu0 0.0
    %251 = vmatpush1.msra.mxu0 0.0
    %252 = vmatprep.subr.mxu0 0.0
    %253 = vmatpush1.msra.mxu0 0.0
    %254 = vmatprep.subr.mxu0 0.0
    %255 = vmatpush1.msra.mxu0 0.0
    %256 = vmatprep.subr.mxu0 0.0
    %257 = vmatpush1.msra.mxu0 0.0
    %258 = vmatprep.subr.mxu0 0.0
    %259 = vmatpush1.msra.mxu0 0.0
    %260 = vmatprep.subr.mxu0 0.0
    %261 = vmatpush1.msra.mxu0 0.0
    %262 = vmatprep.mubr.f32.mxu0 0.0
    %263 = vmatmul.mubr.f32.gmra.mrb[0].mxu0 %v196
    %v264 = vpop.f32.mrb[0].mxu0
    %v265 = vadd.f32 %v191, %v264
    %v266 = vpop.f32.mrb[0].mxu0
    %267 = vdwg.mxu0
    %v268 = vld [vmem:[%s4] sm:$0x1]
    %v270 = vlaneseq
    %v271 = vshrl.u32 %v270, 7
    %v272 = vsub.s32 0, %v271
    %v273 = vrot.slane %v268, %v272
    %v275 = vadd.f32 %v265, %v273
    %v276 = vmax.f32 %v275, 0.0
    %v277 = vld [vmem:[#allocation10] sm:$0xff]
    %v278 = vld [vmem:[#allocation10 + $0x8] sm:$0xff]
    %v279 = vld [vmem:[#allocation10 + $0x10] sm:$0xff]
    %v280 = vld [vmem:[#allocation10 + $0x18] sm:$0xff]
    %v281 = vld [vmem:[%s7] sm:$0x1]
    %v283 = vlaneseq
    %v284 = vshrl.u32 %v283, 7
    %v285 = vsub.s32 0, %v284
    %v286 = vrot.slane %v281, %v285
    %v289 = vsel %vm194, %v276, 0
    %291 = vmatprep.subr.mxu0 0.0
    %292 = vmatpush1.msra.mxu0 %v277
    %293 = vmatprep.subr.mxu0 0.0
    %294 = vmatpush1.msra.mxu0 %v278
    %295 = vmatprep.subr.mxu0 0.0
    %296 = vmatpush1.msra.mxu0 %v279
    %297 = vmatprep.subr.mxu0 0.0
    %298 = vmatpush1.msra.mxu0 %v280
    %299 = vmatprep.subr.mxu0 0.0
    %300 = vmatpush1.msra.mxu0 0.0
    %301 = vmatprep.subr.mxu0 0.0
    %302 = vmatpush1.msra.mxu0 0.0
    %303 = vmatprep.subr.mxu0 0.0
    %304 = vmatpush1.msra.mxu0 0.0
    %305 = vmatprep.subr.mxu0 0.0
    %306 = vmatpush1.msra.mxu0 0.0
    %307 = vmatprep.subr.mxu0 0.0
    %308 = vmatpush1.msra.mxu0 0.0
    %309 = vmatprep.subr.mxu0 0.0
    %310 = vmatpush1.msra.mxu0 0.0
    %311 = vmatprep.subr.mxu0 0.0
    %312 = vmatpush1.msra.mxu0 0.0
    %313 = vmatprep.subr.mxu0 0.0
    %314 = vmatpush1.msra.mxu0 0.0
    %315 = vmatprep.subr.mxu0 0.0
    %316 = vmatpush1.msra.mxu0 0.0
    %317 = vmatprep.subr.mxu0 0.0
    %318 = vmatpush1.msra.mxu0 0.0
    %319 = vmatprep.subr.mxu0 0.0
    %320 = vmatpush1.msra.mxu0 0.0
    %321 = vmatprep.subr.mxu0 0.0
    %322 = vmatpush1.msra.mxu0 0.0
    %323 = vmatprep.subr.mxu0 0.0
    %324 = vmatpush1.msra.mxu0 0.0
    %325 = vmatprep.subr.mxu0 0.0
    %326 = vmatpush1.msra.mxu0 0.0
    %327 = vmatprep.subr.mxu0 0.0
    %328 = vmatpush1.msra.mxu0 0.0
    %329 = vmatprep.subr.mxu0 0.0
    %330 = vmatpush1.msra.mxu0 0.0
    %331 = vmatprep.subr.mxu0 0.0
    %332 = vmatpush1.msra.mxu0 0.0
    %333 = vmatprep.subr.mxu0 0.0
    %334 = vmatpush1.msra.mxu0 0.0
    %335 = vmatprep.subr.mxu0 0.0
    %336 = vmatpush1.msra.mxu0 0.0
    %337 = vmatprep.subr.mxu0 0.0
    %338 = vmatpush1.msra.mxu0 0.0
    %339 = vmatprep.subr.mxu0 0.0
    %340 = vmatpush1.msra.mxu0 0.0
    %341 = vmatprep.subr.mxu0 0.0
    %342 = vmatpush1.msra.mxu0 0.0
    %343 = vmatprep.subr.mxu0 0.0
    %344 = vmatpush1.msra.mxu0 0.0
    %345 = vmatprep.subr.mxu0 0.0
    %346 = vmatpush1.msra.mxu0 0.0
    %347 = vmatprep.subr.mxu0 0.0
    %348 = vmatpush1.msra.mxu0 0.0
    %349 = vmatprep.subr.mxu0 0.0
    %350 = vmatpush1.msra.mxu0 0.0
    %351 = vmatprep.subr.mxu0 0.0
    %352 = vmatpush1.msra.mxu0 0.0
    %353 = vmatprep.subr.mxu0 0.0
    %354 = vmatpush1.msra.mxu0 0.0
    %355 = vmatprep.mubr.f32.mxu0 0.0
    %356 = vmatmul.mubr.f32.gmra.mrb[0].mxu0 %v289
    %v357 = vpop.f32.mrb[0].mxu0
    %v358 = vadd.f32 %v286, %v357
    %v359 = vpop.f32.mrb[0].mxu0
    %360 = vdwg.mxu0
    %v361 = vtanh.pop %v358
    %v362 = vld [vmem:[#allocation11] sm:$0xff]
    %v363 = vld [vmem:[#allocation11 + $0x8] sm:$0xff]
    %v364 = vld [vmem:[#allocation11 + $0x10] sm:$0xff]
    %v365 = vld [vmem:[#allocation11 + $0x18] sm:$0xff]
    %v366 = vld [vmem:[%s8] sm:$0x1]
    %v368 = vlaneseq
    %v369 = vshrl.u32 %v368, 7
    %v370 = vsub.s32 0, %v369
    %v371 = vrot.slane %v366, %v370
    %373 = vmatprep.subr.mxu0 0.0
    %374 = vmatpush1.msra.mxu0 %v362
    %375 = vmatprep.subr.mxu0 0.0
    %376 = vmatpush1.msra.mxu0 %v363
    %377 = vmatprep.subr.mxu0 0.0
    %378 = vmatpush1.msra.mxu0 %v364
    %379 = vmatprep.subr.mxu0 0.0
    %380 = vmatpush1.msra.mxu0 %v365
    %381 = vmatprep.subr.mxu0 0.0
    %382 = vmatpush1.msra.mxu0 0.0
    %383 = vmatprep.subr.mxu0 0.0
    %384 = vmatpush1.msra.mxu0 0.0
    %385 = vmatprep.subr.mxu0 0.0
    %386 = vmatpush1.msra.mxu0 0.0
    %387 = vmatprep.subr.mxu0 0.0
    %388 = vmatpush1.msra.mxu0 0.0
    %389 = vmatprep.subr.mxu0 0.0
    %390 = vmatpush1.msra.mxu0 0.0
    %391 = vmatprep.subr.mxu0 0.0
    %392 = vmatpush1.msra.mxu0 0.0
    %393 = vmatprep.subr.mxu0 0.0
    %394 = vmatpush1.msra.mxu0 0.0
    %395 = vmatprep.subr.mxu0 0.0
    %396 = vmatpush1.msra.mxu0 0.0
    %397 = vmatprep.subr.mxu0 0.0
    %398 = vmatpush1.msra.mxu0 0.0
    %399 = vmatprep.subr.mxu0 0.0
    %400 = vmatpush1.msra.mxu0 0.0
    %401 = vmatprep.subr.mxu0 0.0
    %402 = vmatpush1.msra.mxu0 0.0
    %403 = vmatprep.subr.mxu0 0.0
    %404 = vmatpush1.msra.mxu0 0.0
    %405 = vmatprep.subr.mxu0 0.0
    %406 = vmatpush1.msra.mxu0 0.0
    %407 = vmatprep.subr.mxu0 0.0
    %408 = vmatpush1.msra.mxu0 0.0
    %409 = vmatprep.subr.mxu0 0.0
    %410 = vmatpush1.msra.mxu0 0.0
    %411 = vmatprep.subr.mxu0 0.0
    %412 = vmatpush1.msra.mxu0 0.0
    %413 = vmatprep.subr.mxu0 0.0
    %414 = vmatpush1.msra.mxu0 0.0
    %415 = vmatprep.subr.mxu0 0.0
    %416 = vmatpush1.msra.mxu0 0.0
    %417 = vmatprep.subr.mxu0 0.0
    %418 = vmatpush1.msra.mxu0 0.0
    %419 = vmatprep.subr.mxu0 0.0
    %420 = vmatpush1.msra.mxu0 0.0
    %421 = vmatprep.subr.mxu0 0.0
    %422 = vmatpush1.msra.mxu0 0.0
    %423 = vmatprep.subr.mxu0 0.0
    %424 = vmatpush1.msra.mxu0 0.0
    %425 = vmatprep.subr.mxu0 0.0
    %426 = vmatpush1.msra.mxu0 0.0
    %427 = vmatprep.subr.mxu0 0.0
    %428 = vmatpush1.msra.mxu0 0.0
    %429 = vmatprep.subr.mxu0 0.0
    %430 = vmatpush1.msra.mxu0 0.0
    %431 = vmatprep.subr.mxu0 0.0
    %432 = vmatpush1.msra.mxu0 0.0
    %433 = vmatprep.subr.mxu0 0.0
    %434 = vmatpush1.msra.mxu0 0.0
    %435 = vmatprep.subr.mxu0 0.0
    %436 = vmatpush1.msra.mxu0 0.0
    %437 = vmatprep.mubr.f32.mxu0 0.0
    %438 = vmatmul.mubr.f32.gmra.mrb[0].mxu0 %v289
    %v439 = vpop.f32.mrb[0].mxu0
    %v440 = vadd.f32 %v371, %v439
    %v441 = vpop.f32.mrb[0].mxu0
    %442 = vdwg.mxu0
    %v443 = vmul.f32 %v361, 1.442695
    %v444 = vpow.pop %v443
    %v445 = vmul.f32 %v113, %v444
    %v446 = vadd.f32 %v445, %v440
    %v447 = vsel %vm194, %v361, 0.0
    %448 = vadd.xlane.f32.xlu0 %v447
    %v449 = vpop.xlane.xlu0 %448
    %v450 = vadd.f32 %v449, 0.0
    %s451 = scalar_lea.vmem [#allocation7], 32
    %v452 = vld [vmem:[%s451] sm:$0xff]
    %v453 = vld [vmem:[%s451 + $0x8] sm:$0xff]
    %v454 = vld [vmem:[%s451 + $0x10] sm:$0xff]
    %v455 = vld [vmem:[%s451 + $0x18] sm:$0xff]
    %s456 = scalar_lea.vmem [#allocation8], 8
    %v457 = vld [vmem:[%s456] sm:$0xff]
    %458 = vmatprep.subr.mxu0 0.0
    %459 = vmatpush1.msra.mxu0 %v457
    %460 = vmatprep.subr.mxu0 0.0
    %461 = vmatpush1.msra.mxu0 0.0
    %462 = vmatprep.subr.mxu0 0.0
    %463 = vmatpush1.msra.mxu0 0.0
    %464 = vmatprep.subr.mxu0 0.0
    %465 = vmatpush1.msra.mxu0 0.0
    %466 = vmatprep.subr.mxu0 0.0
    %467 = vmatpush1.msra.mxu0 0.0
    %468 = vmatprep.subr.mxu0 0.0
    %469 = vmatpush1.msra.mxu0 0.0
    %470 = vmatprep.subr.mxu0 0.0
    %471 = vmatpush1.msra.mxu0 0.0
    %472 = vmatprep.subr.mxu0 0.0
    %473 = vmatpush1.msra.mxu0 0.0
    %474 = vmatprep.subr.mxu0 0.0
    %475 = vmatpush1.msra.mxu0 0.0
    %476 = vmatprep.subr.mxu0 0.0
    %477 = vmatpush1.msra.mxu0 0.0
    %478 = vmatprep.subr.mxu0 0.0
    %479 = vmatpush1.msra.mxu0 0.0
    %480 = vmatprep.subr.mxu0 0.0
    %481 = vmatpush1.msra.mxu0 0.0
    %482 = vmatprep.subr.mxu0 0.0
    %483 = vmatpush1.msra.mxu0 0.0
    %484 = vmatprep.subr.mxu0 0.0
    %485 = vmatpush1.msra.mxu0 0.0
    %486 = vmatprep.subr.mxu0 0.0
    %487 = vmatpush1.msra.mxu0 0.0
    %488 = vmatprep.subr.mxu0 0.0
    %489 = vmatpush1.msra.mxu0 0.0
    %490 = vmatprep.subr.mxu0 0.0
    %491 = vmatpush1.msra.mxu0 0.0
    %492 = vmatprep.subr.mxu0 0.0
    %493 = vmatpush1.msra.mxu0 0.0
    %494 = vmatprep.subr.mxu0 0.0
    %495 = vmatpush1.msra.mxu0 0.0
    %496 = vmatprep.subr.mxu0 0.0
    %497 = vmatpush1.msra.mxu0 0.0
    %498 = vmatprep.subr.mxu0 0.0
    %499 = vmatpush1.msra.mxu0 0.0
    %500 = vmatprep.subr.mxu0 0.0
    %501 = vmatpush1.msra.mxu0 0.0
    %502 = vmatprep.subr.mxu0 0.0
    %503 = vmatpush1.msra.mxu0 0.0
    %504 = vmatprep.subr.mxu0 0.0
    %505 = vmatpush1.msra.mxu0 0.0
    %506 = vmatprep.subr.mxu0 0.0
    %507 = vmatpush1.msra.mxu0 0.0
    %508 = vmatprep.subr.mxu0 0.0
    %509 = vmatpush1.msra.mxu0 0.0
    %510 = vmatprep.subr.mxu0 0.0
    %511 = vmatpush1.msra.mxu0 0.0
    %512 = vmatprep.subr.mxu0 0.0
    %513 = vmatpush1.msra.mxu0 0.0
    %514 = vmatprep.subr.mxu0 0.0
    %515 = vmatpush1.msra.mxu0 0.0
    %516 = vmatprep.subr.mxu0 0.0
    %517 = vmatpush1.msra.mxu0 0.0
    %518 = vmatprep.subr.mxu0 0.0
    %519 = vmatpush1.msra.mxu0 0.0
    %520 = vmatprep.subr.mxu0 0.0
    %521 = vmatpush1.msra.mxu0 0.0
    %522 = vmatprep.mubr.f32.mxu0 0.0
    %523 = vmatmul.mubr.f32.gmra.mrb[0].mxu0 %v122
    %v524 = vpop.f32.mrb[0].mxu0
    %v525 = vadd.f32 0.0, %v524
    %v526 = vpop.f32.mrb[0].mxu0
    %527 = vdwg.mxu0
    %v529 = vsel %vm194, %v446, 0
    %531 = vmatprep.subr.mxu0 0.0
    %532 = vmatpush1.msra.mxu0 %v452
    %533 = vmatprep.subr.mxu0 0.0
    %534 = vmatpush1.msra.mxu0 %v453
    %535 = vmatprep.subr.mxu0 0.0
    %536 = vmatpush1.msra.mxu0 %v454
    %537 = vmatprep.subr.mxu0 0.0
    %538 = vmatpush1.msra.mxu0 %v455
    %539 = vmatprep.subr.mxu0 0.0
    %540 = vmatpush1.msra.mxu0 0.0
    %541 = vmatprep.subr.mxu0 0.0
    %542 = vmatpush1.msra.mxu0 0.0
    %543 = vmatprep.subr.mxu0 0.0
    %544 = vmatpush1.msra.mxu0 0.0
    %545 = vmatprep.subr.mxu0 0.0
    %546 = vmatpush1.msra.mxu0 0.0
    %547 = vmatprep.subr.mxu0 0.0
    %548 = vmatpush1.msra.mxu0 0.0
    %549 = vmatprep.subr.mxu0 0.0
    %550 = vmatpush1.msra.mxu0 0.0
    %551 = vmatprep.subr.mxu0 0.0
    %552 = vmatpush1.msra.mxu0 0.0
    %553 = vmatprep.subr.mxu0 0.0
    %554 = vmatpush1.msra.mxu0 0.0
    %555 = vmatprep.subr.mxu0 0.0
    %556 = vmatpush1.msra.mxu0 0.0
    %557 = vmatprep.subr.mxu0 0.0
    %558 = vmatpush1.msra.mxu0 0.0
    %559 = vmatprep.subr.mxu0 0.0
    %560 = vmatpush1.msra.mxu0 0.0
    %561 = vmatprep.subr.mxu0 0.0
    %562 = vmatpush1.msra.mxu0 0.0
    %563 = vmatprep.subr.mxu0 0.0
    %564 = vmatpush1.msra.mxu0 0.0
    %565 = vmatprep.subr.mxu0 0.0
    %566 = vmatpush1.msra.mxu0 0.0
    %567 = vmatprep.subr.mxu0 0.0
    %568 = vmatpush1.msra.mxu0 0.0
    %569 = vmatprep.subr.mxu0 0.0
    %570 = vmatpush1.msra.mxu0 0.0
    %571 = vmatprep.subr.mxu0 0.0
    %572 = vmatpush1.msra.mxu0 0.0
    %573 = vmatprep.subr.mxu0 0.0
    %574 = vmatpush1.msra.mxu0 0.0
    %575 = vmatprep.subr.mxu0 0.0
    %576 = vmatpush1.msra.mxu0 0.0
    %577 = vmatprep.subr.mxu0 0.0
    %578 = vmatpush1.msra.mxu0 0.0
    %579 = vmatprep.subr.mxu0 0.0
    %580 = vmatpush1.msra.mxu0 0.0
    %581 = vmatprep.subr.mxu0 0.0
    %582 = vmatpush1.msra.mxu0 0.0
    %583 = vmatprep.subr.mxu0 0.0
    %584 = vmatpush1.msra.mxu0 0.0
    %585 = vmatprep.subr.mxu0 0.0
    %586 = vmatpush1.msra.mxu0 0.0
    %587 = vmatprep.subr.mxu0 0.0
    %588 = vmatpush1.msra.mxu0 0.0
    %589 = vmatprep.subr.mxu0 0.0
    %590 = vmatpush1.msra.mxu0 0.0
    %591 = vmatprep.subr.mxu0 0.0
    %592 = vmatpush1.msra.mxu0 0.0
    %593 = vmatprep.subr.mxu0 0.0
    %594 = vmatpush1.msra.mxu0 0.0
    %595 = vmatprep.mubr.f32.mxu0 0.0
    %596 = vmatmul.mubr.f32.gmra.mrb[0].mxu0 %v529
    %v597 = vpop.f32.mrb[0].mxu0
    %v598 = vadd.f32 %v525, %v597
    %v599 = vpop.f32.mrb[0].mxu0
    %600 = vdwg.mxu0
    %s601 = scalar_lea.vmem %s4, 1
    %v602 = vld [vmem:[%s601] sm:$0x1]
    %v604 = vlaneseq
    %v605 = vshrl.u32 %v604, 7
    %v606 = vsub.s32 0, %v605
    %v607 = vrot.slane %v602, %v606
    %v609 = vadd.f32 %v598, %v607
    %v610 = vmax.f32 %v609, 0.0
    %s611 = scalar_lea.vmem [#allocation10], 32
    %v612 = vld [vmem:[%s611] sm:$0xff]
    %v613 = vld [vmem:[%s611 + $0x8] sm:$0xff]
    %v614 = vld [vmem:[%s611 + $0x10] sm:$0xff]
    %v615 = vld [vmem:[%s611 + $0x18] sm:$0xff]
    %s616 = scalar_lea.vmem %s7, 1
    %v617 = vld [vmem:[%s616] sm:$0x1]
    %v619 = vlaneseq
    %v620 = vshrl.u32 %v619, 7
    %v621 = vsub.s32 0, %v620
    %v622 = vrot.slane %v617, %v621
    %v625 = vsel %vm194, %v610, 0
    %627 = vmatprep.subr.mxu0 0.0
    %628 = vmatpush1.msra.mxu0 %v612
    %629 = vmatprep.subr.mxu0 0.0
    %630 = vmatpush1.msra.mxu0 %v613
    %631 = vmatprep.subr.mxu0 0.0
    %632 = vmatpush1.msra.mxu0 %v614
    %633 = vmatprep.subr.mxu0 0.0
    %634 = vmatpush1.msra.mxu0 %v615
    %635 = vmatprep.subr.mxu0 0.0
    %636 = vmatpush1.msra.mxu0 0.0
    %637 = vmatprep.subr.mxu0 0.0
    %638 = vmatpush1.msra.mxu0 0.0
    %639 = vmatprep.subr.mxu0 0.0
    %640 = vmatpush1.msra.mxu0 0.0
    %641 = vmatprep.subr.mxu0 0.0
    %642 = vmatpush1.msra.mxu0 0.0
    %643 = vmatprep.subr.mxu0 0.0
    %644 = vmatpush1.msra.mxu0 0.0
    %645 = vmatprep.subr.mxu0 0.0
    %646 = vmatpush1.msra.mxu0 0.0
    %647 = vmatprep.subr.mxu0 0.0
    %648 = vmatpush1.msra.mxu0 0.0
    %649 = vmatprep.subr.mxu0 0.0
    %650 = vmatpush1.msra.mxu0 0.0
    %651 = vmatprep.subr.mxu0 0.0
    %652 = vmatpush1.msra.mxu0 0.0
    %653 = vmatprep.subr.mxu0 0.0
    %654 = vmatpush1.msra.mxu0 0.0
    %655 = vmatprep.subr.mxu0 0.0
    %656 = vmatpush1.msra.mxu0 0.0
    %657 = vmatprep.subr.mxu0 0.0
    %658 = vmatpush1.msra.mxu0 0.0
    %659 = vmatprep.subr.mxu0 0.0
    %660 = vmatpush1.msra.mxu0 0.0
    %661 = vmatprep.subr.mxu0 0.0
    %662 = vmatpush1.msra.mxu0 0.0
    %663 = vmatprep.subr.mxu0 0.0
    %664 = vmatpush1.msra.mxu0 0.0
    %665 = vmatprep.subr.mxu0 0.0
    %666 = vmatpush1.msra.mxu0 0.0
    %667 = vmatprep.subr.mxu0 0.0
    %668 = vmatpush1.msra.mxu0 0.0
    %669 = vmatprep.subr.mxu0 0.0
    %670 = vmatpush1.msra.mxu0 0.0
    %671 = vmatprep.subr.mxu0 0.0
    %672 = vmatpush1.msra.mxu0 0.0
    %673 = vmatprep.subr.mxu0 0.0
    %674 = vmatpush1.msra.mxu0 0.0
    %675 = vmatprep.subr.mxu0 0.0
    %676 = vmatpush1.msra.mxu0 0.0
    %677 = vmatprep.subr.mxu0 0.0
    %678 = vmatpush1.msra.mxu0 0.0
    %679 = vmatprep.subr.mxu0 0.0
    %680 = vmatpush1.msra.mxu0 0.0
    %681 = vmatprep.subr.mxu0 0.0
    %682 = vmatpush1.msra.mxu0 0.0
    %683 = vmatprep.subr.mxu0 0.0
    %684 = vmatpush1.msra.mxu0 0.0
    %685 = vmatprep.subr.mxu0 0.0
    %686 = vmatpush1.msra.mxu0 0.0
    %687 = vmatprep.subr.mxu0 0.0
    %688 = vmatpush1.msra.mxu0 0.0
    %689 = vmatprep.subr.mxu0 0.0
    %690 = vmatpush1.msra.mxu0 0.0
    %691 = vmatprep.mubr.f32.mxu0 0.0
    %692 = vmatmul.mubr.f32.gmra.mrb[0].mxu0 %v625
    %v693 = vpop.f32.mrb[0].mxu0
    %v694 = vadd.f32 %v622, %v693
    %v695 = vpop.f32.mrb[0].mxu0
    %696 = vdwg.mxu0
    %v697 = vtanh.pop %v694
    %s698 = scalar_lea.vmem [#allocation11], 32
    %v699 = vld [vmem:[%s698] sm:$0xff]
    %v700 = vld [vmem:[%s698 + $0x8] sm:$0xff]
    %v701 = vld [vmem:[%s698 + $0x10] sm:$0xff]
    %v702 = vld [vmem:[%s698 + $0x18] sm:$0xff]
    %s703 = scalar_lea.vmem %s8, 1
    %v704 = vld [vmem:[%s703] sm:$0x1]
    %v706 = vlaneseq
    %v707 = vshrl.u32 %v706, 7
    %v708 = vsub.s32 0, %v707
    %v709 = vrot.slane %v704, %v708
    %711 = vmatprep.subr.mxu0 0.0
    %712 = vmatpush1.msra.mxu0 %v699
    %713 = vmatprep.subr.mxu0 0.0
    %714 = vmatpush1.msra.mxu0 %v700
    %715 = vmatprep.subr.mxu0 0.0
    %716 = vmatpush1.msra.mxu0 %v701
    %717 = vmatprep.subr.mxu0 0.0
    %718 = vmatpush1.msra.mxu0 %v702
    %719 = vmatprep.subr.mxu0 0.0
    %720 = vmatpush1.msra.mxu0 0.0
    %721 = vmatprep.subr.mxu0 0.0
    %722 = vmatpush1.msra.mxu0 0.0
    %723 = vmatprep.subr.mxu0 0.0
    %724 = vmatpush1.msra.mxu0 0.0
    %725 = vmatprep.subr.mxu0 0.0
    %726 = vmatpush1.msra.mxu0 0.0
    %727 = vmatprep.subr.mxu0 0.0
    %728 = vmatpush1.msra.mxu0 0.0
    %729 = vmatprep.subr.mxu0 0.0
    %730 = vmatpush1.msra.mxu0 0.0
    %731 = vmatprep.subr.mxu0 0.0
    %732 = vmatpush1.msra.mxu0 0.0
    %733 = vmatprep.subr.mxu0 0.0
    %734 = vmatpush1.msra.mxu0 0.0
    %735 = vmatprep.subr.mxu0 0.0
    %736 = vmatpush1.msra.mxu0 0.0
    %737 = vmatprep.subr.mxu0 0.0
    %738 = vmatpush1.msra.mxu0 0.0
    %739 = vmatprep.subr.mxu0 0.0
    %740 = vmatpush1.msra.mxu0 0.0
    %741 = vmatprep.subr.mxu0 0.0
    %742 = vmatpush1.msra.mxu0 0.0
    %743 = vmatprep.subr.mxu0 0.0
    %744 = vmatpush1.msra.mxu0 0.0
    %745 = vmatprep.subr.mxu0 0.0
    %746 = vmatpush1.msra.mxu0 0.0
    %747 = vmatprep.subr.mxu0 0.0
    %748 = vmatpush1.msra.mxu0 0.0
    %749 = vmatprep.subr.mxu0 0.0
    %750 = vmatpush1.msra.mxu0 0.0
    %751 = vmatprep.subr.mxu0 0.0
    %752 = vmatpush1.msra.mxu0 0.0
    %753 = vmatprep.subr.mxu0 0.0
    %754 = vmatpush1.msra.mxu0 0.0
    %755 = vmatprep.subr.mxu0 0.0
    %756 = vmatpush1.msra.mxu0 0.0
    %757 = vmatprep.subr.mxu0 0.0
    %758 = vmatpush1.msra.mxu0 0.0
    %759 = vmatprep.subr.mxu0 0.0
    %760 = vmatpush1.msra.mxu0 0.0
    %761 = vmatprep.subr.mxu0 0.0
    %762 = vmatpush1.msra.mxu0 0.0
    %763 = vmatprep.subr.mxu0 0.0
    %764 = vmatpush1.msra.mxu0 0.0
    %765 = vmatprep.subr.mxu0 0.0
    %766 = vmatpush1.msra.mxu0 0.0
    %767 = vmatprep.subr.mxu0 0.0
    %768 = vmatpush1.msra.mxu0 0.0
    %769 = vmatprep.subr.mxu0 0.0
    %770 = vmatpush1.msra.mxu0 0.0
    %771 = vmatprep.subr.mxu0 0.0
    %772 = vmatpush1.msra.mxu0 0.0
    %773 = vmatprep.subr.mxu0 0.0
    %774 = vmatpush1.msra.mxu0 0.0
    %775 = vmatprep.mubr.f32.mxu0 0.0
    %776 = vmatmul.mubr.f32.gmra.mrb[0].mxu0 %v625
    %v777 = vpop.f32.mrb[0].mxu0
    %v778 = vadd.f32 %v709, %v777
    %v779 = vpop.f32.mrb[0].mxu0
    %780 = vdwg.mxu0
    %v781 = vmul.f32 %v697, 1.442695
    %v782 = vpow.pop %v781
    %v783 = vmul.f32 %v446, %v782
    %v784 = vadd.f32 %v783, %v778
    %v785 = vsel %vm194, %v697, 0.0
    %786 = vadd.xlane.f32.xlu0 %v785
    %v787 = vpop.xlane.xlu0 %786
    %v788 = vadd.f32 %v450, %v787
    %s789 = scalar_lea.vmem [#allocation7], 64
    %v790 = vld [vmem:[%s789] sm:$0xff]
    %v791 = vld [vmem:[%s789 + $0x8] sm:$0xff]
    %v792 = vld [vmem:[%s789 + $0x10] sm:$0xff]
    %v793 = vld [vmem:[%s789 + $0x18] sm:$0xff]
    %s794 = scalar_lea.vmem [#allocation8], 16
    %v795 = vld [vmem:[%s794] sm:$0xff]
    %796 = vmatprep.subr.mxu0 0.0
    %797 = vmatpush1.msra.mxu0 %v795
    %798 = vmatprep.subr.mxu0 0.0
    %799 = vmatpush1.msra.mxu0 0.0
    %800 = vmatprep.subr.mxu0 0.0
    %801 = vmatpush1.msra.mxu0 0.0
    %802 = vmatprep.subr.mxu0 0.0
    %803 = vmatpush1.msra.mxu0 0.0
    %804 = vmatprep.subr.mxu0 0.0
    %805 = vmatpush1.msra.mxu0 0.0
    %806 = vmatprep.subr.mxu0 0.0
    %807 = vmatpush1.msra.mxu0 0.0
    %808 = vmatprep.subr.mxu0 0.0
    %809 = vmatpush1.msra.mxu0 0.0
    %810 = vmatprep.subr.mxu0 0.0
    %811 = vmatpush1.msra.mxu0 0.0
    %812 = vmatprep.subr.mxu0 0.0
    %813 = vmatpush1.msra.mxu0 0.0
    %814 = vmatprep.subr.mxu0 0.0
    %815 = vmatpush1.msra.mxu0 0.0
    %816 = vmatprep.subr.mxu0 0.0
    %817 = vmatpush1.msra.mxu0 0.0
    %818 = vmatprep.subr.mxu0 0.0
    %819 = vmatpush1.msra.mxu0 0.0
    %820 = vmatprep.subr.mxu0 0.0
    %821 = vmatpush1.msra.mxu0 0.0
    %822 = vmatprep.subr.mxu0 0.0
    %823 = vmatpush1.msra.mxu0 0.0
    %824 = vmatprep.subr.mxu0 0.0
    %825 = vmatpush1.msra.mxu0 0.0
    %826 = vmatprep.subr.mxu0 0.0
    %827 = vmatpush1.msra.mxu0 0.0
    %828 = vmatprep.subr.mxu0 0.0
    %829 = vmatpush1.msra.mxu0 0.0
    %830 = vmatprep.subr.mxu0 0.0
    %831 = vmatpush1.msra.mxu0 0.0
    %832 = vmatprep.subr.mxu0 0.0
    %833 = vmatpush1.msra.mxu0 0.0
    %834 = vmatprep.subr.mxu0 0.0
    %835 = vmatpush1.msra.mxu0 0.0
    %836 = vmatprep.subr.mxu0 0.0
    %837 = vmatpush1.msra.mxu0 0.0
    %838 = vmatprep.subr.mxu0 0.0
    %839 = vmatpush1.msra.mxu0 0.0
    %840 = vmatprep.subr.mxu0 0.0
    %841 = vmatpush1.msra.mxu0 0.0
    %842 = vmatprep.subr.mxu0 0.0
    %843 = vmatpush1.msra.mxu0 0.0
    %844 = vmatprep.subr.mxu0 0.0
    %845 = vmatpush1.msra.mxu0 0.0
    %846 = vmatprep.subr.mxu0 0.0
    %847 = vmatpush1.msra.mxu0 0.0
    %848 = vmatprep.subr.mxu0 0.0
    %849 = vmatpush1.msra.mxu0 0.0
    %850 = vmatprep.subr.mxu0 0.0
    %851 = vmatpush1.msra.mxu0 0.0
    %852 = vmatprep.subr.mxu0 0.0
    %853 = vmatpush1.msra.mxu0 0.0
    %854 = vmatprep.subr.mxu0 0.0
    %855 = vmatpush1.msra.mxu0 0.0
    %856 = vmatprep.subr.mxu0 0.0
    %857 = vmatpush1.msra.mxu0 0.0
    %858 = vmatprep.subr.mxu0 0.0
    %859 = vmatpush1.msra.mxu0 0.0
    %860 = vmatprep.mubr.f32.mxu0 0.0
    %861 = vmatmul.mubr.f32.gmra.mrb[0].mxu0 %v122
    %v862 = vpop.f32.mrb[0].mxu0
    %v863 = vadd.f32 0.0, %v862
    %v864 = vpop.f32.mrb[0].mxu0
    %865 = vdwg.mxu0
    %v867 = vsel %vm194, %v784, 0
    %869 = vmatprep.subr.mxu0 0.0
    %870 = vmatpush1.msra.mxu0 %v790
    %871 = vmatprep.subr.mxu0 0.0
    %872 = vmatpush1.msra.mxu0 %v791
    %873 = vmatprep.subr.mxu0 0.0
    %874 = vmatpush1.msra.mxu0 %v792
    %875 = vmatprep.subr.mxu0 0.0
    %876 = vmatpush1.msra.mxu0 %v793
    %877 = vmatprep.subr.mxu0 0.0
    %878 = vmatpush1.msra.mxu0 0.0
    %879 = vmatprep.subr.mxu0 0.0
    %880 = vmatpush1.msra.mxu0 0.0
    %881 = vmatprep.subr.mxu0 0.0
    %882 = vmatpush1.msra.mxu0 0.0
    %883 = vmatprep.subr.mxu0 0.0
    %884 = vmatpush1.msra.mxu0 0.0
    %885 = vmatprep.subr.mxu0 0.0
    %886 = vmatpush1.msra.mxu0 0.0
    %887 = vmatprep.subr.mxu0 0.0
    %888 = vmatpush1.msra.mxu0 0.0
    %889 = vmatprep.subr.mxu0 0.0
    %890 = vmatpush1.msra.mxu0 0.0
    %891 = vmatprep.subr.mxu0 0.0
    %892 = vmatpush1.msra.mxu0 0.0
    %893 = vmatprep.subr.mxu0 0.0
    %894 = vmatpush1.msra.mxu0 0.0
    %895 = vmatprep.subr.mxu0 0.0
    %896 = vmatpush1.msra.mxu0 0.0
    %897 = vmatprep.subr.mxu0 0.0
    %898 = vmatpush1.msra.mxu0 0.0
    %899 = vmatprep.subr.mxu0 0.0
    %900 = vmatpush1.msra.mxu0 0.0
    %901 = vmatprep.subr.mxu0 0.0
    %902 = vmatpush1.msra.mxu0 0.0
    %903 = vmatprep.subr.mxu0 0.0
    %904 = vmatpush1.msra.mxu0 0.0
    %905 = vmatprep.subr.mxu0 0.0
    %906 = vmatpush1.msra.mxu0 0.0
    %907 = vmatprep.subr.mxu0 0.0
    %908 = vmatpush1.msra.mxu0 0.0
    %909 = vmatprep.subr.mxu0 0.0
    %910 = vmatpush1.msra.mxu0 0.0
    %911 = vmatprep.subr.mxu0 0.0
    %912 = vmatpush1.msra.mxu0 0.0
    %913 = vmatprep.subr.mxu0 0.0
    %914 = vmatpush1.msra.mxu0 0.0
    %915 = vmatprep.subr.mxu0 0.0
    %916 = vmatpush1.msra.mxu0 0.0
    %917 = vmatprep.subr.mxu0 0.0
    %918 = vmatpush1.msra.mxu0 0.0
    %919 = vmatprep.subr.mxu0 0.0
    %920 = vmatpush1.msra.mxu0 0.0
    %921 = vmatprep.subr.mxu0 0.0
    %922 = vmatpush1.msra.mxu0 0.0
    %923 = vmatprep.subr.mxu0 0.0
    %924 = vmatpush1.msra.mxu0 0.0
    %925 = vmatprep.subr.mxu0 0.0
    %926 = vmatpush1.msra.mxu0 0.0
    %927 = vmatprep.subr.mxu0 0.0
    %928 = vmatpush1.msra.mxu0 0.0
    %929 = vmatprep.subr.mxu0 0.0
    %930 = vmatpush1.msra.mxu0 0.0
    %931 = vmatprep.subr.mxu0 0.0
    %932 = vmatpush1.msra.mxu0 0.0
    %933 = vmatprep.mubr.f32.mxu0 0.0
    %934 = vmatmul.mubr.f32.gmra.mrb[0].mxu0 %v867
    %v935 = vpop.f32.mrb[0].mxu0
    %v936 = vadd.f32 %v863, %v935
    %v937 = vpop.f32.mrb[0].mxu0
    %938 = vdwg.mxu0
    %s939 = scalar_lea.vmem %s4, 2
    %v940 = vld [vmem:[%s939] sm:$0x1]
    %v942 = vlaneseq
    %v943 = vshrl.u32 %v942, 7
    %v944 = vsub.s32 0, %v943
    %v945 = vrot.slane %v940, %v944
    %v947 = vadd.f32 %v936, %v945
    %v948 = vmax.f32 %v947, 0.0
    %s949 = scalar_lea.vmem [#allocation10], 64
    %v950 = vld [vmem:[%s949] sm:$0xff]
    %v951 = vld [vmem:[%s949 + $0x8] sm:$0xff]
    %v952 = vld [vmem:[%s949 + $0x10] sm:$0xff]
    %v953 = vld [vmem:[%s949 + $0x18] sm:$0xff]
    %s954 = scalar_lea.vmem %s7, 2
    %v955 = vld [vmem:[%s954] sm:$0x1]
    %v957 = vlaneseq
    %v958 = vshrl.u32 %v957, 7
    %v959 = vsub.s32 0, %v958
    %v960 = vrot.slane %v955, %v959
    %v963 = vsel %vm194, %v948, 0
    %965 = vmatprep.subr.mxu0 0.0
    %966 = vmatpush1.msra.mxu0 %v950
    %967 = vmatprep.subr.mxu0 0.0
    %968 = vmatpush1.msra.mxu0 %v951
    %969 = vmatprep.subr.mxu0 0.0
    %970 = vmatpush1.msra.mxu0 %v952
    %971 = vmatprep.subr.mxu0 0.0
    %972 = vmatpush1.msra.mxu0 %v953
    %973 = vmatprep.subr.mxu0 0.0
    %974 = vmatpush1.msra.mxu0 0.0
    %975 = vmatprep.subr.mxu0 0.0
    %976 = vmatpush1.msra.mxu0 0.0
    %977 = vmatprep.subr.mxu0 0.0
    %978 = vmatpush1.msra.mxu0 0.0
    %979 = vmatprep.subr.mxu0 0.0
    %980 = vmatpush1.msra.mxu0 0.0
    %981 = vmatprep.subr.mxu0 0.0
    %982 = vmatpush1.msra.mxu0 0.0
    %983 = vmatprep.subr.mxu0 0.0
    %984 = vmatpush1.msra.mxu0 0.0
    %985 = vmatprep.subr.mxu0 0.0
    %986 = vmatpush1.msra.mxu0 0.0
    %987 = vmatprep.subr.mxu0 0.0
    %988 = vmatpush1.msra.mxu0 0.0
    %989 = vmatprep.subr.mxu0 0.0
    %990 = vmatpush1.msra.mxu0 0.0
    %991 = vmatprep.subr.mxu0 0.0
    %992 = vmatpush1.msra.mxu0 0.0
    %993 = vmatprep.subr.mxu0 0.0
    %994 = vmatpush1.msra.mxu0 0.0
    %995 = vmatprep.subr.mxu0 0.0
    %996 = vmatpush1.msra.mxu0 0.0
    %997 = vmatprep.subr.mxu0 0.0
    %998 = vmatpush1.msra.mxu0 0.0
    %999 = vmatprep.subr.mxu0 0.0
    %1000 = vmatpush1.msra.mxu0 0.0
    %1001 = vmatprep.subr.mxu0 0.0
    %1002 = vmatpush1.msra.mxu0 0.0
    %1003 = vmatprep.subr.mxu0 0.0
    %1004 = vmatpush1.msra.mxu0 0.0
    %1005 = vmatprep.subr.mxu0 0.0
    %1006 = vmatpush1.msra.mxu0 0.0
    %1007 = vmatprep.subr.mxu0 0.0
    %1008 = vmatpush1.msra.mxu0 0.0
    %1009 = vmatprep.subr.mxu0 0.0
    %1010 = vmatpush1.msra.mxu0 0.0
    %1011 = vmatprep.subr.mxu0 0.0
    %1012 = vmatpush1.msra.mxu0 0.0
    %1013 = vmatprep.subr.mxu0 0.0
    %1014 = vmatpush1.msra.mxu0 0.0
    %1015 = vmatprep.subr.mxu0 0.0
    %1016 = vmatpush1.msra.mxu0 0.0
    %1017 = vmatprep.subr.mxu0 0.0
    %1018 = vmatpush1.msra.mxu0 0.0
    %1019 = vmatprep.subr.mxu0 0.0
    %1020 = vmatpush1.msra.mxu0 0.0
    %1021 = vmatprep.subr.mxu0 0.0
    %1022 = vmatpush1.msra.mxu0 0.0
    %1023 = vmatprep.subr.mxu0 0.0
    %1024 = vmatpush1.msra.mxu0 0.0
    %1025 = vmatprep.subr.mxu0 0.0
    %1026 = vmatpush1.msra.mxu0 0.0
    %1027 = vmatprep.subr.mxu0 0.0
    %1028 = vmatpush1.msra.mxu0 0.0
    %1029 = vmatprep.mubr.f32.mxu0 0.0
    %1030 = vmatmul.mubr.f32.gmra.mrb[0].mxu0 %v963
    %v1031 = vpop.f32.mrb[0].mxu0
    %v1032 = vadd.f32 %v960, %v1031
    %v1033 = vpop.f32.mrb[0].mxu0
    %1034 = vdwg.mxu0
    %v1035 = vtanh.pop %v1032
    %s1036 = scalar_lea.vmem [#allocation11], 64
    %v1037 = vld [vmem:[%s1036] sm:$0xff]
    %v1038 = vld [vmem:[%s1036 + $0x8] sm:$0xff]
    %v1039 = vld [vmem:[%s1036 + $0x10] sm:$0xff]
    %v1040 = vld [vmem:[%s1036 + $0x18] sm:$0xff]
    %s1041 = scalar_lea.vmem %s8, 2
    %v1042 = vld [vmem:[%s1041] sm:$0x1]
    %v1044 = vlaneseq
    %v1045 = vshrl.u32 %v1044, 7
    %v1046 = vsub.s32 0, %v1045
    %v1047 = vrot.slane %v1042, %v1046
    %1049 = vmatprep.subr.mxu0 0.0
    %1050 = vmatpush1.msra.mxu0 %v1037
    %1051 = vmatprep.subr.mxu0 0.0
    %1052 = vmatpush1.msra.mxu0 %v1038
    %1053 = vmatprep.subr.mxu0 0.0
    %1054 = vmatpush1.msra.mxu0 %v1039
    %1055 = vmatprep.subr.mxu0 0.0
    %1056 = vmatpush1.msra.mxu0 %v1040
    %1057 = vmatprep.subr.mxu0 0.0
    %1058 = vmatpush1.msra.mxu0 0.0
    %1059 = vmatprep.subr.mxu0 0.0
    %1060 = vmatpush1.msra.mxu0 0.0
    %1061 = vmatprep.subr.mxu0 0.0
    %1062 = vmatpush1.msra.mxu0 0.0
    %1063 = vmatprep.subr.mxu0 0.0
    %1064 = vmatpush1.msra.mxu0 0.0
    %1065 = vmatprep.subr.mxu0 0.0
    %1066 = vmatpush1.msra.mxu0 0.0
    %1067 = vmatprep.subr.mxu0 0.0
    %1068 = vmatpush1.msra.mxu0 0.0
    %1069 = vmatprep.subr.mxu0 0.0
    %1070 = vmatpush1.msra.mxu0 0.0
    %1071 = vmatprep.subr.mxu0 0.0
    %1072 = vmatpush1.msra.mxu0 0.0
    %1073 = vmatprep.subr.mxu0 0.0
    %1074 = vmatpush1.msra.mxu0 0.0
    %1075 = vmatprep.subr.mxu0 0.0
    %1076 = vmatpush1.msra.mxu0 0.0
    %1077 = vmatprep.subr.mxu0 0.0
    %1078 = vmatpush1.msra.mxu0 0.0
    %1079 = vmatprep.subr.mxu0 0.0
    %1080 = vmatpush1.msra.mxu0 0.0
    %1081 = vmatprep.subr.mxu0 0.0
    %1082 = vmatpush1.msra.mxu0 0.0
    %1083 = vmatprep.subr.mxu0 0.0
    %1084 = vmatpush1.msra.mxu0 0.0
    %1085 = vmatprep.subr.mxu0 0.0
    %1086 = vmatpush1.msra.mxu0 0.0
    %1087 = vmatprep.subr.mxu0 0.0
    %1088 = vmatpush1.msra.mxu0 0.0
    %1089 = vmatprep.subr.mxu0 0.0
    %1090 = vmatpush1.msra.mxu0 0.0
    %1091 = vmatprep.subr.mxu0 0.0
    %1092 = vmatpush1.msra.mxu0 0.0
    %1093 = vmatprep.subr.mxu0 0.0
    %1094 = vmatpush1.msra.mxu0 0.0
    %1095 = vmatprep.subr.mxu0 0.0
    %1096 = vmatpush1.msra.mxu0 0.0
    %1097 = vmatprep.subr.mxu0 0.0
    %1098 = vmatpush1.msra.mxu0 0.0
    %1099 = vmatprep.subr.mxu0 0.0
    %1100 = vmatpush1.msra.mxu0 0.0
    %1101 = vmatprep.subr.mxu0 0.0
    %1102 = vmatpush1.msra.mxu0 0.0
    %1103 = vmatprep.subr.mxu0 0.0
    %1104 = vmatpush1.msra.mxu0 0.0
    %1105 = vmatprep.subr.mxu0 0.0
    %1106 = vmatpush1.msra.mxu0 0.0
    %1107 = vmatprep.subr.mxu0 0.0
    %1108 = vmatpush1.msra.mxu0 0.0
    %1109 = vmatprep.subr.mxu0 0.0
    %1110 = vmatpush1.msra.mxu0 0.0
    %1111 = vmatprep.subr.mxu0 0.0
    %1112 = vmatpush1.msra.mxu0 0.0
    %1113 = vmatprep.mubr.f32.mxu0 0.0
    %1114 = vmatmul.mubr.f32.gmra.mrb[0].mxu0 %v963
    %v1115 = vpop.f32.mrb[0].mxu0
    %v1116 = vadd.f32 %v1047, %v1115
    %v1117 = vpop.f32.mrb[0].mxu0
    %1118 = vdwg.mxu0
    %v1119 = vmul.f32 %v1035, 1.442695
    %v1120 = vpow.pop %v1119
    %v1121 = vmul.f32 %v784, %v1120
    %v1122 = vadd.f32 %v1121, %v1116
    %v1123 = vsel %vm194, %v1035, 0.0
    %1124 = vadd.xlane.f32.xlu0 %v1123
    %v1125 = vpop.xlane.xlu0 %1124
    %v1126 = vadd.f32 %v788, %v1125
    %1127 = vst.msk [vmem:[#allocation13] sm:$0xff] %vm194, %v1122
    %vm1128 = vcmask 7168
    %1129 = vst.msk [vmem:[%s10] sm:$0xff] %vm1128, %v1126
    // Predicated region
    $region62: #{tpu_custom_call.1} parent=1 // pred_check
      _
    $region63: #{tpu_custom_call.1} parent=1 // pred_check_branch
      %1131 = sbr.rel (0) target = $region65
    $region64: #{tpu_custom_call.1} parent=1 // pred_region
      %s1133 = ssub.s32 128, 128
      %1134 = vsyncadd [#allocation4], %s1133
      %s1136 = sshll.u32 [#allocation13], 4
      %s1137 = int_to_ptr.vmem [resolvable:$true] %s1136
      %1139 = dma.vmem_to_hbm [thread:$0]  %s1137, 128, %s9, [#allocation4]
    $region65: #{tpu_custom_call.1} parent=1 // pred_fallthru
      _
    // Predicated region
    $region66: #{tpu_custom_call.1} parent=1 // pred_check
      _
    $region67: #{tpu_custom_call.1} parent=1 // pred_check_branch
      %1141 = sbr.rel (0) target = $region69
    $region68: #{tpu_custom_call.1} parent=1 // pred_region
      _
    $region69: #{tpu_custom_call.1} parent=1 // pred_fallthru
      _
    // Predicated region
    $region70: #{tpu_custom_call.1} parent=1 // pred_check
      _
    $region71: #{tpu_custom_call.1} parent=1 // pred_check_branch
      %1143 = sbr.rel (0) target = $region73
    $region72: #{tpu_custom_call.1} parent=1 // pred_region
      %1144 = dma.done [#allocation4], 128
    $region73: #{tpu_custom_call.1} parent=1 // pred_fallthru
      _
    // Predicated region
    $region74: #{tpu_custom_call.1} parent=1 // pred_check
      _
    $region75: #{tpu_custom_call.1} parent=1 // pred_check_branch
      %1146 = sbr.rel (0) target = $region77
    $region76: #{tpu_custom_call.1} parent=1 // pred_region
      _
    $region77: #{tpu_custom_call.1} parent=1 // pred_fallthru
      _
    %1147 = vsyncpa [#allocation3], 1
    %1148 = vsyncpa [#allocation6], 1
    %1149 = vsyncpa [#allocation9], 1
    %1150 = vsyncpa [#allocation12], 1
    %1151 = vsyncpa [#allocation4], 1

</llo_original>
